<compile_context>
chip_gen: v6e
topology: v6e:2x2x1
jax: 0.10.0
libtpu: 0.0.40
codegen_flags: <defaults>
</compile_context>

<pallas_src>
import jax
import jax.numpy as jnp
from jax.experimental import pallas as pl
from jax.experimental.pallas import tpu as pltpu


def _attention_kernel(x_cn_ref, x_res_ref, wv_ref, bv_ref, wm_ref, bm_ref, o_ref):
    """Attention for a block of `bb` batches.

    x_cn_ref : (bb, C, N)  NCHW input slabs (channel-major) -> projections / K-side.
    x_res_ref: (bb, N, C)  same bytes, row-major reinterpret (PyTorch `.view` quirk).
    wv_ref   : (C, C)      gamma * Wv^T   (gamma pre-folded by the wrapper).
    bv_ref   : (1, C)      gamma * bv.
    wm_ref   : (C, C)      M = Wq^T Wk    (collapsed Q/K projection).
    bm_ref   : (1, C)      bm = bq^T Wk   (the only Q/K bias term softmax keeps).
    o_ref    : (bb, N, C)  gamma * attn_out + x, already in final row-major order.
    """
    bb = x_cn_ref.shape[0]
    for b in range(bb):                       # static unroll, bb <= 4
        xc = x_cn_ref[b]                      # (C, N) natural NCHW slab
        xt = xc.T                             # (N, C): one tiny XLU transpose

        # Value projection (gamma already folded into wv/bv).
        v = jnp.dot(xt, wv_ref[...], preferred_element_type=jnp.float32) + bv_ref[...]

        # Scores: softmax(Q K^T) == softmax((X M + bm) X^T) — the RHS of the
        # score matmul is the (C, N) slab consumed in place (no K transpose,
        # no packed-lane slicing, no selector matmul).
        t = jnp.dot(xt, wm_ref[...], preferred_element_type=jnp.float32) + bm_ref[...]
        s = jnp.dot(t, xc, preferred_element_type=jnp.float32)          # (N, N)

        s = s - jnp.max(s, axis=-1, keepdims=True)
        p = jnp.exp(s)
        # One approximate reciprocal per row (EUP) instead of a divide per element.
        p = p * pl.reciprocal(jnp.sum(p, axis=-1, keepdims=True), approx=True)

        o = jnp.dot(p, v, preferred_element_type=jnp.float32)           # (N, C)

        # Fused residual.  `o` is row-major (N, C) and x_res_ref[b] is the
        # row-major reinterpret of x[b], so this reproduces
        # `gamma * out.view(*x.size()) + x` exactly (PyTorch quirk included).
        o_ref[b] = o + x_res_ref[b]


def _pick_block_batch(B, N):
    """Batches per grid step: fill the MXU row dim (bb*N >= 256) but cap the
    static in-kernel unroll at 4 and keep >= 2 grid steps when B allows so the
    BlockSpec pipeline can overlap the x DMAs with compute (and both v7x
    TensorCores get work)."""
    bb = max(1, min(4, B, -(-256 // max(N, 1))))
    while B % bb:
        bb -= 1
    if B // bb < 2:
        for cand in range(bb - 1, 0, -1):
            if B % cand == 0 and B // cand >= 2:
                bb = cand
                break
    return bb


def attention_forward(x_nchw, params, gamma=None):
    """Pallas forward of the PyTorch Attention module (NCHW in, NCHW out)."""
    B, C, H, W = x_nchw.shape
    N = H * W
    if gamma is None:
        gamma = params["gamma"]
    gamma = jnp.asarray(gamma, jnp.float32).reshape(())

    x_nchw = x_nchw.astype(jnp.float32)
    # Two metadata-only reinterpretations of the same HBM buffer:
    x_cn = x_nchw.reshape(B, C, N)     # true (C, N) slabs      -> projections / scores
    x_res = x_nchw.reshape(B, N, C)    # row-major (N, C) view  -> residual (.view quirk)

    wq = params["wq"].astype(jnp.float32)   # (C8, C)
    wk = params["wk"].astype(jnp.float32)   # (C8, C)
    wv = params["wv"].astype(jnp.float32)   # (C, C)
    bq = params["bq"].astype(jnp.float32)
    bv = params["bv"].astype(jnp.float32)

    # gamma folded into the value projection: gamma*(attn@V) == attn@(gamma*V).
    wv_g = gamma * wv.T                       # (C, C)
    bv_g = (gamma * bv).reshape(1, C)         # (1, C)
    # Collapsed Q/K projection (terms constant along the softmax axis dropped).
    wm = wq.T @ wk                            # (C, C)  = Wq^T Wk
    bm = (bq @ wk).reshape(1, C)              # (1, C)  = bq^T Wk

    bb = _pick_block_batch(B, N)
    grid = (B // bb,)

    o_res = pl.pallas_call(
        _attention_kernel,
        out_shape=jax.ShapeDtypeStruct((B, N, C), jnp.float32),
        grid_spec=pltpu.PrefetchScalarGridSpec(
            num_scalar_prefetch=0,
            grid=grid,
            in_specs=[
                pl.BlockSpec((bb, C, N), lambda i: (i, 0, 0)),   # x, (C, N) slabs
                pl.BlockSpec((bb, N, C), lambda i: (i, 0, 0)),   # x, row-major (N, C)
                pl.BlockSpec((C, C), lambda i: (0, 0)),          # gamma * Wv^T
                pl.BlockSpec((1, C), lambda i: (0, 0)),          # gamma * bv
                pl.BlockSpec((C, C), lambda i: (0, 0)),          # M = Wq^T Wk
                pl.BlockSpec((1, C), lambda i: (0, 0)),          # bm = bq^T Wk
            ],
            out_specs=pl.BlockSpec((bb, N, C), lambda i: (i, 0, 0)),
        ),
        compiler_params=pltpu.CompilerParams(
            dimension_semantics=("parallel",)),
    )(x_cn, x_res, wv_g, bv_g, wm, bm)

    # Residual and PyTorch's `.view(*x.size())` were applied in-kernel; this is
    # a metadata-only reshape back to NCHW.
    return o_res.reshape(B, C, H, W)


def attention_reference(x_nchw, params, gamma=None):
    """Pure-JAX reference matching the PyTorch forward exactly."""
    B, C, H, W = x_nchw.shape
    N = H * W
    if gamma is None:
        gamma = params["gamma"]
    x_flat = x_nchw.reshape(B, C, N)                                     # (B, C, N)
    q = jnp.einsum("oc,bcn->bon", params["wq"], x_flat) + params["bq"][None, :, None]
    k = jnp.einsum("oc,bcn->bon", params["wk"], x_flat) + params["bk"][None, :, None]
    v = jnp.einsum("oc,bcn->bon", params["wv"], x_flat) + params["bv"][None, :, None]
    q = jnp.transpose(q, (0, 2, 1))                                      # (B, N, C8)
    k = jnp.transpose(k, (0, 2, 1))                                      # (B, N, C8)
    attn = jax.nn.softmax(jnp.einsum("bnc,bmc->bnm", q, k), axis=2)      # (B, N, N)
    out = jnp.einsum("bnm,bmc->bnc", attn, jnp.transpose(v, (0, 2, 1)))  # (B, N, C)
    out = out.reshape(B, C, H, W)                                        # the .view quirk
    return gamma * out + x_nchw


def init_params(key, in_dim):
    c8 = in_dim // 8
    k1, k2, k3, k4, k5, k6 = jax.random.split(key, 6)
    scale = 1.0 / jnp.sqrt(in_dim)
    return {
        "wq": jax.random.uniform(k1, (c8, in_dim), jnp.float32, -1, 1) * scale,
        "bq": jax.random.uniform(k2, (c8,), jnp.float32, -1, 1) * scale,
        "wk": jax.random.uniform(k3, (c8, in_dim), jnp.float32, -1, 1) * scale,
        "bk": jax.random.uniform(k4, (c8,), jnp.float32, -1, 1) * scale,
        "wv": jax.random.uniform(k5, (in_dim, in_dim), jnp.float32, -1, 1) * scale,
        "bv": jax.random.uniform(k6, (in_dim,), jnp.float32, -1, 1) * scale,
        "gamma": jnp.zeros((), jnp.float32),   # nn.Parameter(torch.zeros(1))
    }


if __name__ == "__main__":
    # in_dim=16 -> query/key channels = 2; N = 64; bb = 4 -> 2 "parallel" steps.
    B, C, H, W = 8, 16, 8, 8
    key = jax.random.PRNGKey(0)
    kx, kp = jax.random.split(key)
    x = jax.random.normal(kx, (B, C, H, W), jnp.float32)
    params = init_params(kp, C)

    # Module-init gamma (= 0) forward: output must equal the input exactly.
    out = jax.block_until_ready(attention_forward(x, params))
    ref = attention_reference(x, params)
    assert jnp.allclose(out, ref, atol=1e-5, rtol=1e-5), "gamma=0 mismatch"

    # Exercise the attention path with a nonzero gamma.  Tolerance 2e-3 covers
    # the approximate (EUP) reciprocal in the softmax normalization.
    out_g = jax.block_until_ready(attention_forward(x, params, gamma=jnp.float32(0.5)))
    ref_g = attention_reference(x, params, gamma=jnp.float32(0.5))
    assert jnp.allclose(out_g, ref_g, atol=2e-3, rtol=2e-3), "gamma=0.5 mismatch"

    print("KERNEL_OK")
</pallas_src>

<mosaic_0001>
module attributes {stable_mosaic.version = 11 : i64} {
  func.func @_attention_kernel(%arg0: i32, %arg1: memref<4x16x64xf32, #tpu.memory_space<vmem>>, %arg2: memref<4x64x16xf32, #tpu.memory_space<vmem>>, %arg3: memref<16x16xf32, #tpu.memory_space<vmem>>, %arg4: memref<1x16xf32, #tpu.memory_space<vmem>>, %arg5: memref<16x16xf32, #tpu.memory_space<vmem>>, %arg6: memref<1x16xf32, #tpu.memory_space<vmem>>, %arg7: memref<4x64x16xf32, #tpu.memory_space<vmem>>) attributes {dimension_semantics = [#tpu.dimension_semantics<parallel>], iteration_bounds = array<i64: 2>, scalar_prefetch = 0 : i64, scratch_operands = 0 : i64, tpu.core_type = #tpu.core_type<tc>, window_params = [{transform_indices = @transform_0, window_bounds = array<i64: 4, 16, 64>}, {transform_indices = @transform_1, window_bounds = array<i64: 4, 64, 16>}, {pipeline_mode = #tpu.pipeline_mode<synchronous>, transform_indices = @transform_2, window_bounds = array<i64: 16, 16>}, {pipeline_mode = #tpu.pipeline_mode<synchronous>, transform_indices = @transform_3, window_bounds = array<i64: 1, 16>}, {pipeline_mode = #tpu.pipeline_mode<synchronous>, transform_indices = @transform_4, window_bounds = array<i64: 16, 16>}, {pipeline_mode = #tpu.pipeline_mode<synchronous>, transform_indices = @transform_5, window_bounds = array<i64: 1, 16>}, {transform_indices = @transform_6, window_bounds = array<i64: 4, 64, 16>}]} {
    %c0 = arith.constant 0 : index
    %c0_0 = arith.constant 0 : index
    %c0_1 = arith.constant 0 : index
    %0 = vector.load %arg1[%c0, %c0_0, %c0_1] : memref<4x16x64xf32, #tpu.memory_space<vmem>>, vector<1x16x64xf32>
    %1 = vector.shape_cast %0 : vector<1x16x64xf32> to vector<16x64xf32>
    %2 = tpu.transpose %1, [1, 0] : vector<16x64xf32> -> vector<64x16xf32>
    %c0_2 = arith.constant 0 : index
    %c0_3 = arith.constant 0 : index
    %3 = vector.load %arg3[%c0_2, %c0_3] : memref<16x16xf32, #tpu.memory_space<vmem>>, vector<16x16xf32>
    %cst = arith.constant dense<0.000000e+00> : vector<64x16xf32>
    %4 = tpu.matmul %2, %3, %cst {dimension_numbers = #tpu.dot_dimension_numbers<[1], [0], [0], [1], [0, 0, 1, 1], [], []>} : vector<64x16xf32>, vector<16x16xf32>, vector<64x16xf32> -> vector<64x16xf32>
    %c0_4 = arith.constant 0 : index
    %c0_5 = arith.constant 0 : index
    %5 = vector.load %arg4[%c0_4, %c0_5] : memref<1x16xf32, #tpu.memory_space<vmem>>, vector<1x16xf32>
    %6 = vector.broadcast %5 : vector<1x16xf32> to vector<64x16xf32>
    %7 = arith.addf %4, %6 : vector<64x16xf32>
    %c0_6 = arith.constant 0 : index
    %c0_7 = arith.constant 0 : index
    %8 = vector.load %arg5[%c0_6, %c0_7] : memref<16x16xf32, #tpu.memory_space<vmem>>, vector<16x16xf32>
    %cst_8 = arith.constant dense<0.000000e+00> : vector<64x16xf32>
    %9 = tpu.matmul %2, %8, %cst_8 {dimension_numbers = #tpu.dot_dimension_numbers<[1], [0], [0], [1], [0, 0, 1, 1], [], []>} : vector<64x16xf32>, vector<16x16xf32>, vector<64x16xf32> -> vector<64x16xf32>
    %c0_9 = arith.constant 0 : index
    %c0_10 = arith.constant 0 : index
    %10 = vector.load %arg6[%c0_9, %c0_10] : memref<1x16xf32, #tpu.memory_space<vmem>>, vector<1x16xf32>
    %11 = vector.broadcast %10 : vector<1x16xf32> to vector<64x16xf32>
    %12 = arith.addf %9, %11 : vector<64x16xf32>
    %cst_11 = arith.constant dense<0.000000e+00> : vector<64x64xf32>
    %13 = tpu.matmul %12, %1, %cst_11 {dimension_numbers = #tpu.dot_dimension_numbers<[1], [0], [0], [1], [0, 0, 1, 1], [], []>} : vector<64x16xf32>, vector<16x64xf32>, vector<64x64xf32> -> vector<64x64xf32>
    %cst_12 = arith.constant dense<0xFF800000> : vector<64xf32>
    %14 = vector.multi_reduction <maximumf>, %13, %cst_12 [1] : vector<64x64xf32> to vector<64xf32>
    %15 = vector.shape_cast %14 : vector<64xf32> to vector<64x1xf32>
    %16 = vector.broadcast %15 : vector<64x1xf32> to vector<64x64xf32>
    %17 = arith.subf %13, %16 : vector<64x64xf32>
    %18 = math.exp %17 : vector<64x64xf32>
    %cst_13 = arith.constant dense<0.000000e+00> : vector<64xf32>
    %19 = vector.multi_reduction <add>, %18, %cst_13 [1] : vector<64x64xf32> to vector<64xf32>
    %20 = vector.shape_cast %19 : vector<64xf32> to vector<64x1xf32>
    %21 = tpu.reciprocal %20 {approx = true} : vector<64x1xf32> -> vector<64x1xf32>
    %22 = vector.broadcast %21 : vector<64x1xf32> to vector<64x64xf32>
    %23 = arith.mulf %18, %22 : vector<64x64xf32>
    %cst_14 = arith.constant dense<0.000000e+00> : vector<64x16xf32>
    %24 = tpu.matmul %23, %7, %cst_14 {dimension_numbers = #tpu.dot_dimension_numbers<[1], [0], [0], [1], [0, 0, 1, 1], [], []>} : vector<64x64xf32>, vector<64x16xf32>, vector<64x16xf32> -> vector<64x16xf32>
    %c0_15 = arith.constant 0 : index
    %c0_16 = arith.constant 0 : index
    %c0_17 = arith.constant 0 : index
    %25 = vector.load %arg2[%c0_15, %c0_16, %c0_17] : memref<4x64x16xf32, #tpu.memory_space<vmem>>, vector<1x64x16xf32>
    %26 = vector.shape_cast %25 : vector<1x64x16xf32> to vector<64x16xf32>
    %27 = arith.addf %24, %26 : vector<64x16xf32>
    %c0_18 = arith.constant 0 : index
    %c0_19 = arith.constant 0 : index
    %c0_20 = arith.constant 0 : index
    %28 = vector.load %arg7[%c0_18, %c0_19, %c0_20] : memref<4x64x16xf32, #tpu.memory_space<vmem>>, vector<1x64x16xf32>
    %29 = vector.shape_cast %28 : vector<1x64x16xf32> to vector<64x16xf32>
    %30 = vector.shape_cast %27 : vector<64x16xf32> to vector<1x64x16xf32>
    tpu.vector_store %arg7[%c0_18, %c0_19, %c0_20], %30 {strides = array<i32>} : memref<4x64x16xf32, #tpu.memory_space<vmem>>, vector<1x64x16xf32>,
    %c1 = arith.constant 1 : index
    %c0_21 = arith.constant 0 : index
    %c0_22 = arith.constant 0 : index
    %31 = vector.load %arg1[%c1, %c0_21, %c0_22] : memref<4x16x64xf32, #tpu.memory_space<vmem>>, vector<1x16x64xf32>
    %32 = vector.shape_cast %31 : vector<1x16x64xf32> to vector<16x64xf32>
    %33 = tpu.transpose %32, [1, 0] : vector<16x64xf32> -> vector<64x16xf32>
    %c0_23 = arith.constant 0 : index
    %c0_24 = arith.constant 0 : index
    %34 = vector.load %arg3[%c0_23, %c0_24] : memref<16x16xf32, #tpu.memory_space<vmem>>, vector<16x16xf32>
    %cst_25 = arith.constant dense<0.000000e+00> : vector<64x16xf32>
    %35 = tpu.matmul %33, %34, %cst_25 {dimension_numbers = #tpu.dot_dimension_numbers<[1], [0], [0], [1], [0, 0, 1, 1], [], []>} : vector<64x16xf32>, vector<16x16xf32>, vector<64x16xf32> -> vector<64x16xf32>
    %c0_26 = arith.constant 0 : index
    %c0_27 = arith.constant 0 : index
    %36 = vector.load %arg4[%c0_26, %c0_27] : memref<1x16xf32, #tpu.memory_space<vmem>>, vector<1x16xf32>
    %37 = vector.broadcast %36 : vector<1x16xf32> to vector<64x16xf32>
    %38 = arith.addf %35, %37 : vector<64x16xf32>
    %c0_28 = arith.constant 0 : index
    %c0_29 = arith.constant 0 : index
    %39 = vector.load %arg5[%c0_28, %c0_29] : memref<16x16xf32, #tpu.memory_space<vmem>>, vector<16x16xf32>
    %cst_30 = arith.constant dense<0.000000e+00> : vector<64x16xf32>
    %40 = tpu.matmul %33, %39, %cst_30 {dimension_numbers = #tpu.dot_dimension_numbers<[1], [0], [0], [1], [0, 0, 1, 1], [], []>} : vector<64x16xf32>, vector<16x16xf32>, vector<64x16xf32> -> vector<64x16xf32>
    %c0_31 = arith.constant 0 : index
    %c0_32 = arith.constant 0 : index
    %41 = vector.load %arg6[%c0_31, %c0_32] : memref<1x16xf32, #tpu.memory_space<vmem>>, vector<1x16xf32>
    %42 = vector.broadcast %41 : vector<1x16xf32> to vector<64x16xf32>
    %43 = arith.addf %40, %42 : vector<64x16xf32>
    %cst_33 = arith.constant dense<0.000000e+00> : vector<64x64xf32>
    %44 = tpu.matmul %43, %32, %cst_33 {dimension_numbers = #tpu.dot_dimension_numbers<[1], [0], [0], [1], [0, 0, 1, 1], [], []>} : vector<64x16xf32>, vector<16x64xf32>, vector<64x64xf32> -> vector<64x64xf32>
    %cst_34 = arith.constant dense<0xFF800000> : vector<64xf32>
    %45 = vector.multi_reduction <maximumf>, %44, %cst_34 [1] : vector<64x64xf32> to vector<64xf32>
    %46 = vector.shape_cast %45 : vector<64xf32> to vector<64x1xf32>
    %47 = vector.broadcast %46 : vector<64x1xf32> to vector<64x64xf32>
    %48 = arith.subf %44, %47 : vector<64x64xf32>
    %49 = math.exp %48 : vector<64x64xf32>
    %cst_35 = arith.constant dense<0.000000e+00> : vector<64xf32>
    %50 = vector.multi_reduction <add>, %49, %cst_35 [1] : vector<64x64xf32> to vector<64xf32>
    %51 = vector.shape_cast %50 : vector<64xf32> to vector<64x1xf32>
    %52 = tpu.reciprocal %51 {approx = true} : vector<64x1xf32> -> vector<64x1xf32>
    %53 = vector.broadcast %52 : vector<64x1xf32> to vector<64x64xf32>
    %54 = arith.mulf %49, %53 : vector<64x64xf32>
    %cst_36 = arith.constant dense<0.000000e+00> : vector<64x16xf32>
    %55 = tpu.matmul %54, %38, %cst_36 {dimension_numbers = #tpu.dot_dimension_numbers<[1], [0], [0], [1], [0, 0, 1, 1], [], []>} : vector<64x64xf32>, vector<64x16xf32>, vector<64x16xf32> -> vector<64x16xf32>
    %c1_37 = arith.constant 1 : index
    %c0_38 = arith.constant 0 : index
    %c0_39 = arith.constant 0 : index
    %56 = vector.load %arg2[%c1_37, %c0_38, %c0_39] : memref<4x64x16xf32, #tpu.memory_space<vmem>>, vector<1x64x16xf32>
    %57 = vector.shape_cast %56 : vector<1x64x16xf32> to vector<64x16xf32>
    %58 = arith.addf %55, %57 : vector<64x16xf32>
    %c1_40 = arith.constant 1 : index
    %c0_41 = arith.constant 0 : index
    %c0_42 = arith.constant 0 : index
    %59 = vector.load %arg7[%c1_40, %c0_41, %c0_42] : memref<4x64x16xf32, #tpu.memory_space<vmem>>, vector<1x64x16xf32>
    %60 = vector.shape_cast %59 : vector<1x64x16xf32> to vector<64x16xf32>
    %61 = vector.shape_cast %58 : vector<64x16xf32> to vector<1x64x16xf32>
    tpu.vector_store %arg7[%c1_40, %c0_41, %c0_42], %61 {strides = array<i32>} : memref<4x64x16xf32, #tpu.memory_space<vmem>>, vector<1x64x16xf32>,
    %c2 = arith.constant 2 : index
    %c0_43 = arith.constant 0 : index
    %c0_44 = arith.constant 0 : index
    %62 = vector.load %arg1[%c2, %c0_43, %c0_44] : memref<4x16x64xf32, #tpu.memory_space<vmem>>, vector<1x16x64xf32>
    %63 = vector.shape_cast %62 : vector<1x16x64xf32> to vector<16x64xf32>
    %64 = tpu.transpose %63, [1, 0] : vector<16x64xf32> -> vector<64x16xf32>
    %c0_45 = arith.constant 0 : index
    %c0_46 = arith.constant 0 : index
    %65 = vector.load %arg3[%c0_45, %c0_46] : memref<16x16xf32, #tpu.memory_space<vmem>>, vector<16x16xf32>
    %cst_47 = arith.constant dense<0.000000e+00> : vector<64x16xf32>
    %66 = tpu.matmul %64, %65, %cst_47 {dimension_numbers = #tpu.dot_dimension_numbers<[1], [0], [0], [1], [0, 0, 1, 1], [], []>} : vector<64x16xf32>, vector<16x16xf32>, vector<64x16xf32> -> vector<64x16xf32>
    %c0_48 = arith.constant 0 : index
    %c0_49 = arith.constant 0 : index
    %67 = vector.load %arg4[%c0_48, %c0_49] : memref<1x16xf32, #tpu.memory_space<vmem>>, vector<1x16xf32>
    %68 = vector.broadcast %67 : vector<1x16xf32> to vector<64x16xf32>
    %69 = arith.addf %66, %68 : vector<64x16xf32>
    %c0_50 = arith.constant 0 : index
    %c0_51 = arith.constant 0 : index
    %70 = vector.load %arg5[%c0_50, %c0_51] : memref<16x16xf32, #tpu.memory_space<vmem>>, vector<16x16xf32>
    %cst_52 = arith.constant dense<0.000000e+00> : vector<64x16xf32>
    %71 = tpu.matmul %64, %70, %cst_52 {dimension_numbers = #tpu.dot_dimension_numbers<[1], [0], [0], [1], [0, 0, 1, 1], [], []>} : vector<64x16xf32>, vector<16x16xf32>, vector<64x16xf32> -> vector<64x16xf32>
    %c0_53 = arith.constant 0 : index
    %c0_54 = arith.constant 0 : index
    %72 = vector.load %arg6[%c0_53, %c0_54] : memref<1x16xf32, #tpu.memory_space<vmem>>, vector<1x16xf32>
    %73 = vector.broadcast %72 : vector<1x16xf32> to vector<64x16xf32>
    %74 = arith.addf %71, %73 : vector<64x16xf32>
    %cst_55 = arith.constant dense<0.000000e+00> : vector<64x64xf32>
    %75 = tpu.matmul %74, %63, %cst_55 {dimension_numbers = #tpu.dot_dimension_numbers<[1], [0], [0], [1], [0, 0, 1, 1], [], []>} : vector<64x16xf32>, vector<16x64xf32>, vector<64x64xf32> -> vector<64x64xf32>
    %cst_56 = arith.constant dense<0xFF800000> : vector<64xf32>
    %76 = vector.multi_reduction <maximumf>, %75, %cst_56 [1] : vector<64x64xf32> to vector<64xf32>
    %77 = vector.shape_cast %76 : vector<64xf32> to vector<64x1xf32>
    %78 = vector.broadcast %77 : vector<64x1xf32> to vector<64x64xf32>
    %79 = arith.subf %75, %78 : vector<64x64xf32>
    %80 = math.exp %79 : vector<64x64xf32>
    %cst_57 = arith.constant dense<0.000000e+00> : vector<64xf32>
    %81 = vector.multi_reduction <add>, %80, %cst_57 [1] : vector<64x64xf32> to vector<64xf32>
    %82 = vector.shape_cast %81 : vector<64xf32> to vector<64x1xf32>
    %83 = tpu.reciprocal %82 {approx = true} : vector<64x1xf32> -> vector<64x1xf32>
    %84 = vector.broadcast %83 : vector<64x1xf32> to vector<64x64xf32>
    %85 = arith.mulf %80, %84 : vector<64x64xf32>
    %cst_58 = arith.constant dense<0.000000e+00> : vector<64x16xf32>
    %86 = tpu.matmul %85, %69, %cst_58 {dimension_numbers = #tpu.dot_dimension_numbers<[1], [0], [0], [1], [0, 0, 1, 1], [], []>} : vector<64x64xf32>, vector<64x16xf32>, vector<64x16xf32> -> vector<64x16xf32>
    %c2_59 = arith.constant 2 : index
    %c0_60 = arith.constant 0 : index
    %c0_61 = arith.constant 0 : index
    %87 = vector.load %arg2[%c2_59, %c0_60, %c0_61] : memref<4x64x16xf32, #tpu.memory_space<vmem>>, vector<1x64x16xf32>
    %88 = vector.shape_cast %87 : vector<1x64x16xf32> to vector<64x16xf32>
    %89 = arith.addf %86, %88 : vector<64x16xf32>
    %c2_62 = arith.constant 2 : index
    %c0_63 = arith.constant 0 : index
    %c0_64 = arith.constant 0 : index
    %90 = vector.load %arg7[%c2_62, %c0_63, %c0_64] : memref<4x64x16xf32, #tpu.memory_space<vmem>>, vector<1x64x16xf32>
    %91 = vector.shape_cast %90 : vector<1x64x16xf32> to vector<64x16xf32>
    %92 = vector.shape_cast %89 : vector<64x16xf32> to vector<1x64x16xf32>
    tpu.vector_store %arg7[%c2_62, %c0_63, %c0_64], %92 {strides = array<i32>} : memref<4x64x16xf32, #tpu.memory_space<vmem>>, vector<1x64x16xf32>,
    %c3 = arith.constant 3 : index
    %c0_65 = arith.constant 0 : index
    %c0_66 = arith.constant 0 : index
    %93 = vector.load %arg1[%c3, %c0_65, %c0_66] : memref<4x16x64xf32, #tpu.memory_space<vmem>>, vector<1x16x64xf32>
    %94 = vector.shape_cast %93 : vector<1x16x64xf32> to vector<16x64xf32>
    %95 = tpu.transpose %94, [1, 0] : vector<16x64xf32> -> vector<64x16xf32>
    %c0_67 = arith.constant 0 : index
    %c0_68 = arith.constant 0 : index
    %96 = vector.load %arg3[%c0_67, %c0_68] : memref<16x16xf32, #tpu.memory_space<vmem>>, vector<16x16xf32>
    %cst_69 = arith.constant dense<0.000000e+00> : vector<64x16xf32>
    %97 = tpu.matmul %95, %96, %cst_69 {dimension_numbers = #tpu.dot_dimension_numbers<[1], [0], [0], [1], [0, 0, 1, 1], [], []>} : vector<64x16xf32>, vector<16x16xf32>, vector<64x16xf32> -> vector<64x16xf32>
    %c0_70 = arith.constant 0 : index
    %c0_71 = arith.constant 0 : index
    %98 = vector.load %arg4[%c0_70, %c0_71] : memref<1x16xf32, #tpu.memory_space<vmem>>, vector<1x16xf32>
    %99 = vector.broadcast %98 : vector<1x16xf32> to vector<64x16xf32>
    %100 = arith.addf %97, %99 : vector<64x16xf32>
    %c0_72 = arith.constant 0 : index
    %c0_73 = arith.constant 0 : index
    %101 = vector.load %arg5[%c0_72, %c0_73] : memref<16x16xf32, #tpu.memory_space<vmem>>, vector<16x16xf32>
    %cst_74 = arith.constant dense<0.000000e+00> : vector<64x16xf32>
    %102 = tpu.matmul %95, %101, %cst_74 {dimension_numbers = #tpu.dot_dimension_numbers<[1], [0], [0], [1], [0, 0, 1, 1], [], []>} : vector<64x16xf32>, vector<16x16xf32>, vector<64x16xf32> -> vector<64x16xf32>
    %c0_75 = arith.constant 0 : index
    %c0_76 = arith.constant 0 : index
    %103 = vector.load %arg6[%c0_75, %c0_76] : memref<1x16xf32, #tpu.memory_space<vmem>>, vector<1x16xf32>
    %104 = vector.broadcast %103 : vector<1x16xf32> to vector<64x16xf32>
    %105 = arith.addf %102, %104 : vector<64x16xf32>
    %cst_77 = arith.constant dense<0.000000e+00> : vector<64x64xf32>
    %106 = tpu.matmul %105, %94, %cst_77 {dimension_numbers = #tpu.dot_dimension_numbers<[1], [0], [0], [1], [0, 0, 1, 1], [], []>} : vector<64x16xf32>, vector<16x64xf32>, vector<64x64xf32> -> vector<64x64xf32>
    %cst_78 = arith.constant dense<0xFF800000> : vector<64xf32>
    %107 = vector.multi_reduction <maximumf>, %106, %cst_78 [1] : vector<64x64xf32> to vector<64xf32>
    %108 = vector.shape_cast %107 : vector<64xf32> to vector<64x1xf32>
    %109 = vector.broadcast %108 : vector<64x1xf32> to vector<64x64xf32>
    %110 = arith.subf %106, %109 : vector<64x64xf32>
    %111 = math.exp %110 : vector<64x64xf32>
    %cst_79 = arith.constant dense<0.000000e+00> : vector<64xf32>
    %112 = vector.multi_reduction <add>, %111, %cst_79 [1] : vector<64x64xf32> to vector<64xf32>
    %113 = vector.shape_cast %112 : vector<64xf32> to vector<64x1xf32>
    %114 = tpu.reciprocal %113 {approx = true} : vector<64x1xf32> -> vector<64x1xf32>
    %115 = vector.broadcast %114 : vector<64x1xf32> to vector<64x64xf32>
    %116 = arith.mulf %111, %115 : vector<64x64xf32>
    %cst_80 = arith.constant dense<0.000000e+00> : vector<64x16xf32>
    %117 = tpu.matmul %116, %100, %cst_80 {dimension_numbers = #tpu.dot_dimension_numbers<[1], [0], [0], [1], [0, 0, 1, 1], [], []>} : vector<64x64xf32>, vector<64x16xf32>, vector<64x16xf32> -> vector<64x16xf32>
    %c3_81 = arith.constant 3 : index
    %c0_82 = arith.constant 0 : index
    %c0_83 = arith.constant 0 : index
    %118 = vector.load %arg2[%c3_81, %c0_82, %c0_83] : memref<4x64x16xf32, #tpu.memory_space<vmem>>, vector<1x64x16xf32>
    %119 = vector.shape_cast %118 : vector<1x64x16xf32> to vector<64x16xf32>
    %120 = arith.addf %117, %119 : vector<64x16xf32>
    %c3_84 = arith.constant 3 : index
    %c0_85 = arith.constant 0 : index
    %c0_86 = arith.constant 0 : index
    %121 = vector.load %arg7[%c3_84, %c0_85, %c0_86] : memref<4x64x16xf32, #tpu.memory_space<vmem>>, vector<1x64x16xf32>
    %122 = vector.shape_cast %121 : vector<1x64x16xf32> to vector<64x16xf32>
    %123 = vector.shape_cast %120 : vector<64x16xf32> to vector<1x64x16xf32>
    tpu.vector_store %arg7[%c3_84, %c0_85, %c0_86], %123 {strides = array<i32>} : memref<4x64x16xf32, #tpu.memory_space<vmem>>, vector<1x64x16xf32>,
    return
  }
  func.func @transform_0(%arg0: i32) -> (i32, i32, i32) {
    %c0_i32 = arith.constant 0 : i32
    %c0_i32_0 = arith.constant 0 : i32
    %c0_i32_1 = arith.constant 0 : i32
    return %arg0, %c0_i32, %c0_i32_0 : i32, i32, i32
  }
  func.func @transform_1(%arg0: i32) -> (i32, i32, i32) {
    %c0_i32 = arith.constant 0 : i32
    %c0_i32_0 = arith.constant 0 : i32
    %c0_i32_1 = arith.constant 0 : i32
    return %arg0, %c0_i32, %c0_i32_0 : i32, i32, i32
  }
  func.func @transform_2(%arg0: i32) -> (i32, i32) {
    %c0_i32 = arith.constant 0 : i32
    %c0_i32_0 = arith.constant 0 : i32
    %c0_i32_1 = arith.constant 0 : i32
    return %c0_i32, %c0_i32_0 : i32, i32
  }
  func.func @transform_3(%arg0: i32) -> (i32, i32) {
    %c0_i32 = arith.constant 0 : i32
    %c0_i32_0 = arith.constant 0 : i32
    %c0_i32_1 = arith.constant 0 : i32
    return %c0_i32, %c0_i32_0 : i32, i32
  }
  func.func @transform_4(%arg0: i32) -> (i32, i32) {
    %c0_i32 = arith.constant 0 : i32
    %c0_i32_0 = arith.constant 0 : i32
    %c0_i32_1 = arith.constant 0 : i32
    return %c0_i32, %c0_i32_0 : i32, i32
  }
  func.func @transform_5(%arg0: i32) -> (i32, i32) {
    %c0_i32 = arith.constant 0 : i32
    %c0_i32_0 = arith.constant 0 : i32
    %c0_i32_1 = arith.constant 0 : i32
    return %c0_i32, %c0_i32_0 : i32, i32
  }
  func.func @transform_6(%arg0: i32) -> (i32, i32, i32) {
    %c0_i32 = arith.constant 0 : i32
    %c0_i32_0 = arith.constant 0 : i32
    %c0_i32_1 = arith.constant 0 : i32
    return %arg0, %c0_i32, %c0_i32_0 : i32, i32, i32
  }
}

</mosaic_0001>

<llo_original>
// kernel: tpu_custom_call.1
$region0: #{tpu_custom_call.1}
  #allocation0 [shape = 'u32[]', space=smem, size = 0x4, offset = 0x4, fixed_abs, tag = 'smem constant byte address 0x4 - core index']
  #allocation1 [shape = 'u32[144,128]{1,0:T(1,128)}', space=vmem, size = 0x12000, scoped, tag = 'internal scratch']
  %s0 = inlined_call_operand.vmem [shape: f32[8,16,64], index: 0, kind: input, shape index: {}]
  %s1 = inlined_call_operand.vmem [shape: f32[8,64,16], index: 1, kind: input, shape index: {}]
  %s2 = inlined_call_operand.vmem [shape: f32[16,16], index: 2, kind: input, shape index: {}]
  %s3 = inlined_call_operand.vmem [shape: f32[1,16], index: 3, kind: input, shape index: {}]
  %s4 = inlined_call_operand.vmem [shape: f32[16,16], index: 4, kind: input, shape index: {}]
  %s5 = inlined_call_operand.vmem [shape: f32[1,16], index: 5, kind: input, shape index: {}]
  %s6 = inlined_call_operand.vmem [shape: f32[8,64,16], index: 6, kind: output, shape index: {}]
  %s7 = sld [smem:[#allocation0]]
  $region57: #{tpu_custom_call.1} parent=0
    _
  %s9 = ssub.s32 1, %s7
  %s10 = scalar_select 0, %s9, %s7
  loop: start=0, step=1, limit=4
  $region2: #{tpu_custom_call.1} parent=0 // loop_pre_header
    _
  $region3: #{tpu_custom_call.1} parent=0 // loop_header
    %s12 = sphi 0, %s16
    %p13 = scmp.ge.s32.totalorder %s12, 4
    %s22 = sphi 0, %s24
    %s25 = sphi 0, %s22
    %s26 = sphi 0, %s25
    %s42 = sphi 0, %s26
    %s48 = sphi 0, %s50
    %s51 = sphi 0, %s48
    %s52 = sphi 0, %s51
    %s68 = sphi 0, %s52
    %s72 = sphi 0, %s72
    %s74 = sphi 0, %s72
    %s75 = sphi 0, %s74
    %s89 = sphi 0, %s75
    %s93 = sphi 0, %s93
    %s95 = sphi 0, %s93
    %s96 = sphi 0, %s95
    %s110 = sphi 0, %s96
    %s114 = sphi 0, %s114
    %s116 = sphi 0, %s114
    %s117 = sphi 0, %s116
    %s131 = sphi 0, %s117
    %s135 = sphi 0, %s135
    %s137 = sphi 0, %s135
    %s138 = sphi 0, %s137
    %s152 = sphi 0, %s138
    %s158 = sphi 0, %s160
    %s161 = sphi 0, %s158
    %s162 = sphi 0, %s161
    %s178 = sphi 0, %s162
  $region4: #{tpu_custom_call.1} parent=0 // loop_header_branch
    %15 = sbr.rel (%p13) target = $region8
  $region5: #{tpu_custom_call.1} parent=0 // loop_body
    %s17 = ssub.s32 %s12, 1
    %s18 = ssub.s32 %s12, 2
    %s19 = sadd.s32 %s12, 1
    %s20 = ssub.s32 %s12, %s19
    %p21 = scmp.eq.s32.totalorder %s20, 0
    %s23 = sadd.s32 %s22, 1
    %s24 = scalar_select %p21, %s22, %s23
    %p27 = pneg %p21
    %p28 = scmp.eq.s32.totalorder %s12, 1
    %p29 = por %p27, %p28
    %p30 = scmp.ne.s32.totalorder %s22, %s25
    %p31 = scmp.eq.s32.totalorder %s12, 0
    %p32 = por %p30, %p31
    %p33 = scmp.ne.s32.totalorder %s22, %s25
    %p34 = scmp.eq.s32.totalorder %s17, 1
    %p35 = por %p33, %p34
    %p36 = scmp.ne.s32.totalorder %s25, %s26
    %p37 = scmp.eq.s32.totalorder %s17, 0
    %p38 = por %p36, %p37
    %p39 = scmp.ne.s32.totalorder %s25, %s26
    %p40 = scmp.eq.s32.totalorder %s18, 1
    %p41 = por %p39, %p40
    %p43 = scmp.ne.s32.totalorder %s26, %s42
    %p44 = scmp.eq.s32.totalorder %s18, 0
    %p45 = por %p43, %p44
    %s46 = ssub.s32 %s12, %s19
    %p47 = scmp.eq.s32.totalorder %s46, 0
    %s49 = sadd.s32 %s48, 1
    %s50 = scalar_select %p47, %s48, %s49
    %p53 = pneg %p47
    %p54 = scmp.eq.s32.totalorder %s12, 1
    %p55 = por %p53, %p54
    %p56 = scmp.ne.s32.totalorder %s48, %s51
    %p57 = scmp.eq.s32.totalorder %s12, 0
    %p58 = por %p56, %p57
    %p59 = scmp.ne.s32.totalorder %s48, %s51
    %p60 = scmp.eq.s32.totalorder %s17, 1
    %p61 = por %p59, %p60
    %p62 = scmp.ne.s32.totalorder %s51, %s52
    %p63 = scmp.eq.s32.totalorder %s17, 0
    %p64 = por %p62, %p63
    %p65 = scmp.ne.s32.totalorder %s51, %s52
    %p66 = scmp.eq.s32.totalorder %s18, 1
    %p67 = por %p65, %p66
    %p69 = scmp.ne.s32.totalorder %s52, %s68
    %p70 = scmp.eq.s32.totalorder %s18, 0
    %p71 = por %p69, %p70
    %s73 = sadd.s32 %s72, 1
    %p76 = scmp.eq.s32.totalorder %s12, 1
    %p77 = scmp.ne.s32.totalorder %s72, %s74
    %p78 = scmp.eq.s32.totalorder %s12, 0
    %p79 = por %p77, %p78
    %p80 = scmp.ne.s32.totalorder %s72, %s74
    %p81 = scmp.eq.s32.totalorder %s17, 1
    %p82 = por %p80, %p81
    %p83 = scmp.ne.s32.totalorder %s74, %s75
    %p84 = scmp.eq.s32.totalorder %s17, 0
    %p85 = por %p83, %p84
    %p86 = scmp.ne.s32.totalorder %s74, %s75
    %p87 = scmp.eq.s32.totalorder %s18, 1
    %p88 = por %p86, %p87
    %p90 = scmp.ne.s32.totalorder %s75, %s89
    %p91 = scmp.eq.s32.totalorder %s18, 0
    %p92 = por %p90, %p91
    %s94 = sadd.s32 %s93, 1
    %p97 = scmp.eq.s32.totalorder %s12, 1
    %p98 = scmp.ne.s32.totalorder %s93, %s95
    %p99 = scmp.eq.s32.totalorder %s12, 0
    %p100 = por %p98, %p99
    %p101 = scmp.ne.s32.totalorder %s93, %s95
    %p102 = scmp.eq.s32.totalorder %s17, 1
    %p103 = por %p101, %p102
    %p104 = scmp.ne.s32.totalorder %s95, %s96
    %p105 = scmp.eq.s32.totalorder %s17, 0
    %p106 = por %p104, %p105
    %p107 = scmp.ne.s32.totalorder %s95, %s96
    %p108 = scmp.eq.s32.totalorder %s18, 1
    %p109 = por %p107, %p108
    %p111 = scmp.ne.s32.totalorder %s96, %s110
    %p112 = scmp.eq.s32.totalorder %s18, 0
    %p113 = por %p111, %p112
    %s115 = sadd.s32 %s114, 1
    %p118 = scmp.eq.s32.totalorder %s12, 1
    %p119 = scmp.ne.s32.totalorder %s114, %s116
    %p120 = scmp.eq.s32.totalorder %s12, 0
    %p121 = por %p119, %p120
    %p122 = scmp.ne.s32.totalorder %s114, %s116
    %p123 = scmp.eq.s32.totalorder %s17, 1
    %p124 = por %p122, %p123
    %p125 = scmp.ne.s32.totalorder %s116, %s117
    %p126 = scmp.eq.s32.totalorder %s17, 0
    %p127 = por %p125, %p126
    %p128 = scmp.ne.s32.totalorder %s116, %s117
    %p129 = scmp.eq.s32.totalorder %s18, 1
    %p130 = por %p128, %p129
    %p132 = scmp.ne.s32.totalorder %s117, %s131
    %p133 = scmp.eq.s32.totalorder %s18, 0
    %p134 = por %p132, %p133
    %s136 = sadd.s32 %s135, 1
    %p139 = scmp.eq.s32.totalorder %s12, 1
    %p140 = scmp.ne.s32.totalorder %s135, %s137
    %p141 = scmp.eq.s32.totalorder %s12, 0
    %p142 = por %p140, %p141
    %p143 = scmp.ne.s32.totalorder %s135, %s137
    %p144 = scmp.eq.s32.totalorder %s17, 1
    %p145 = por %p143, %p144
    %p146 = scmp.ne.s32.totalorder %s137, %s138
    %p147 = scmp.eq.s32.totalorder %s17, 0
    %p148 = por %p146, %p147
    %p149 = scmp.ne.s32.totalorder %s137, %s138
    %p150 = scmp.eq.s32.totalorder %s18, 1
    %p151 = por %p149, %p150
    %p153 = scmp.ne.s32.totalorder %s138, %s152
    %p154 = scmp.eq.s32.totalorder %s18, 0
    %p155 = por %p153, %p154
    %s156 = ssub.s32 %s12, %s19
    %p157 = scmp.eq.s32.totalorder %s156, 0
    %s159 = sadd.s32 %s158, 1
    %s160 = scalar_select %p157, %s158, %s159
    %p163 = pneg %p157
    %p164 = scmp.eq.s32.totalorder %s12, 1
    %p165 = por %p163, %p164
    %p166 = scmp.ne.s32.totalorder %s158, %s161
    %p167 = scmp.eq.s32.totalorder %s12, 0
    %p168 = por %p166, %p167
    %p169 = scmp.ne.s32.totalorder %s158, %s161
    %p170 = scmp.eq.s32.totalorder %s17, 1
    %p171 = por %p169, %p170
    %p172 = scmp.ne.s32.totalorder %s161, %s162
    %p173 = scmp.eq.s32.totalorder %s17, 0
    %p174 = por %p172, %p173
    %p175 = scmp.ne.s32.totalorder %s161, %s162
    %p176 = scmp.eq.s32.totalorder %s18, 1
    %p177 = por %p175, %p176
    %p179 = scmp.ne.s32.totalorder %s162, %s178
    %p180 = scmp.eq.s32.totalorder %s18, 0
    %p181 = por %p179, %p180
    %p182 = scmp.le.s32.totalorder 1, %s12
    %p183 = scmp.lt.s32.totalorder %s12, 3
    %p184 = pnand %p182, %p183
    %p185 = pneg %p184
    // Predicated region
    $region9: #{tpu_custom_call.1} parent=5 // pred_check
      _
    $region10: #{tpu_custom_call.1} parent=5 // pred_check_branch
      %187 = sbr.rel (%p184) target = $region12
    $region11: #{tpu_custom_call.1} parent=5 // pred_region
      %s188 = ssub.s32 %s12, 1
      // Predicated region
      $region13: #{tpu_custom_call.1} parent=11 // pred_check
        %p189 = pneg %p85
      $region14: #{tpu_custom_call.1} parent=11 // pred_check_branch
        %191 = sbr.rel (%p189) target = $region16
      $region15: #{tpu_custom_call.1} parent=11 // pred_region
        _
      $region16: #{tpu_custom_call.1} parent=11 // pred_fallthru
        _
      // Predicated region
      $region17: #{tpu_custom_call.1} parent=11 // pred_check
        %p192 = pneg %p106
      $region18: #{tpu_custom_call.1} parent=11 // pred_check_branch
        %194 = sbr.rel (%p192) target = $region20
      $region19: #{tpu_custom_call.1} parent=11 // pred_region
        _
      $region20: #{tpu_custom_call.1} parent=11 // pred_fallthru
        _
      // Predicated region
      $region21: #{tpu_custom_call.1} parent=11 // pred_check
        %p195 = pneg %p127
      $region22: #{tpu_custom_call.1} parent=11 // pred_check_branch
        %197 = sbr.rel (%p195) target = $region24
      $region23: #{tpu_custom_call.1} parent=11 // pred_region
        _
      $region24: #{tpu_custom_call.1} parent=11 // pred_fallthru
        _
      // Predicated region
      $region25: #{tpu_custom_call.1} parent=11 // pred_check
        %p198 = pneg %p148
      $region26: #{tpu_custom_call.1} parent=11 // pred_check_branch
        %200 = sbr.rel (%p198) target = $region28
      $region27: #{tpu_custom_call.1} parent=11 // pred_region
        _
      $region28: #{tpu_custom_call.1} parent=11 // pred_fallthru
        _
    $region12: #{tpu_custom_call.1} parent=5 // pred_fallthru
      _
    %p201 = scmp.lt.s32.totalorder %s12, 2
    // Predicated region
    $region29: #{tpu_custom_call.1} parent=5 // pred_check
      %p202 = pneg %p201
    $region30: #{tpu_custom_call.1} parent=5 // pred_check_branch
      %204 = sbr.rel (%p202) target = $region32
    $region31: #{tpu_custom_call.1} parent=5 // pred_region
      // Predicated region
      $region33: #{tpu_custom_call.1} parent=31 // pred_check
        %p205 = pneg %p32
      $region34: #{tpu_custom_call.1} parent=31 // pred_check_branch
        %207 = sbr.rel (%p205) target = $region36
      $region35: #{tpu_custom_call.1} parent=31 // pred_region
        %s208 = smul.u32 4, %s12
        %p209 = scmp.lt.s32.totalorder %s208, 7
        %s210 = scalar_select %p209, %s208, 7
        %s211 = smul.addr %s210, 2
        %s212 = smul.addr %s211, 8
        %s213 = scalar_lea.vmem %s0, %s212
        %s214 = smul.u32 4, %s12
      $region36: #{tpu_custom_call.1} parent=31 // pred_fallthru
        _
      // Predicated region
      $region37: #{tpu_custom_call.1} parent=31 // pred_check
        %p215 = pneg %p58
      $region38: #{tpu_custom_call.1} parent=31 // pred_check_branch
        %217 = sbr.rel (%p215) target = $region40
      $region39: #{tpu_custom_call.1} parent=31 // pred_region
        %s218 = smul.u32 4, %s12
        %p219 = scmp.lt.s32.totalorder %s218, 7
        %s220 = scalar_select %p219, %s218, 7
        %s221 = smul.addr %s220, 8
        %s222 = smul.addr %s221, 8
        %s223 = scalar_lea.vmem %s1, %s222
        %s224 = smul.u32 4, %s12
      $region40: #{tpu_custom_call.1} parent=31 // pred_fallthru
        _
    $region32: #{tpu_custom_call.1} parent=5 // pred_fallthru
      _
    %p225 = scmp.le.s32.totalorder 1, %s12
    %p226 = scmp.lt.s32.totalorder %s12, 3
    %p227 = pnand %p225, %p226
    %p228 = pneg %p227
    // Predicated region
    $region41: #{tpu_custom_call.1} parent=5 // pred_check
      _
    $region42: #{tpu_custom_call.1} parent=5 // pred_check_branch
      %230 = sbr.rel (%p227) target = $region44
    $region43: #{tpu_custom_call.1} parent=5 // pred_region
      %s231 = ssub.s32 %s12, 1
      %s232 = smul.u32 4, %s17
      %p233 = scmp.lt.s32.totalorder %s232, 7
      %s234 = scalar_select %p233, %s232, 7
      %s235 = smul.addr %s234, 2
      %s236 = smul.addr %s235, 8
      %s237 = scalar_lea.vmem %s0, %s236
      %p238 = pneg %p38
      %p239 = pneg %p35
      %s240 = smul.u32 4, %s17
      %p241 = scmp.lt.s32.totalorder %s240, 7
      %s242 = scalar_select %p241, %s240, 7
      %s243 = smul.addr %s242, 8
      %s244 = smul.addr %s243, 8
      %s245 = scalar_lea.vmem %s1, %s244
      %p246 = pneg %p64
      %p247 = pneg %p61
      %p248 = pneg %p85
      %p249 = pneg %p82
      %p250 = pneg %p106
      %p251 = pneg %p103
      %p252 = pneg %p127
      %p253 = pneg %p124
      %p254 = pneg %p148
      %p255 = pneg %p145
      %p256 = pneg %p174
      %p257 = pneg %p171
      %s258 = smul.u32 4, %s17
      %p259 = scmp.lt.s32.totalorder %s258, 7
      %s260 = scalar_select %p259, %s258, 7
      %s261 = smul.addr %s260, 8
      %s262 = smul.addr %s261, 8
      %s263 = scalar_lea.vmem %s6, %s262
      %s264 = smul.u32 4, %s17
      %p265 = scmp.lt.s32.totalorder %s264, 7
      %s266 = scalar_select %p265, %s264, 7
      %s267 = smul.addr %s266, 2
      %s268 = smul.addr %s267, 8
      %s269 = scalar_lea.vmem %s0, %s268
      %s270 = smul.u32 4, %s17
      %s271 = smul.u32 4, %s17
      %p272 = scmp.lt.s32.totalorder %s271, 7
      %s273 = scalar_select %p272, %s271, 7
      %s274 = smul.addr %s273, 8
      %s275 = smul.addr %s274, 8
      %s276 = scalar_lea.vmem %s1, %s275
      %s277 = smul.u32 4, %s17
      %s278 = smul.u32 4, %s17
      %p279 = scmp.lt.s32.totalorder %s278, 7
      %s280 = scalar_select %p279, %s278, 7
      %s281 = smul.addr %s280, 8
      %s282 = smul.addr %s281, 8
      %s283 = scalar_lea.vmem %s6, %s282
      %s284 = smul.u32 4, %s17
      %v285 = vld [vmem:[%s269] sm:$0xff]
      %v286 = vld [vmem:[%s269 + $0x8] sm:$0xff]
      %287 = vxpose.xlu0.b32.start [1/16] %v285, 128
      %288 = vxpose.xlu0.b32.cont [2/16] %v286, 128
      %289 = vxpose.xlu0.b32.cont [3/16] 0.0, 128
      %290 = vxpose.xlu0.b32.cont [4/16] 0.0, 128
      %291 = vxpose.xlu0.b32.cont [5/16] 0.0, 128
      %292 = vxpose.xlu0.b32.cont [6/16] 0.0, 128
      %293 = vxpose.xlu0.b32.cont [7/16] 0.0, 128
      %294 = vxpose.xlu0.b32.cont [8/16] 0.0, 128
      %295 = vxpose.xlu0.b32.cont [9/16] 0.0, 128
      %296 = vxpose.xlu0.b32.cont [10/16] 0.0, 128
      %297 = vxpose.xlu0.b32.cont [11/16] 0.0, 128
      %298 = vxpose.xlu0.b32.cont [12/16] 0.0, 128
      %299 = vxpose.xlu0.b32.cont [13/16] 0.0, 128
      %300 = vxpose.xlu0.b32.cont [14/16] 0.0, 128
      %301 = vxpose.xlu0.b32.cont [15/16] 0.0, 128
      %302 = vxpose.xlu0.b32.end [16/16] 0.0, 128
      %v303 = vpop.trf.xlu0
      %v304 = vpop.trf.xlu0
      %v305 = vpop.trf.xlu0
      %v306 = vpop.trf.xlu0
      %v307 = vpop.trf.xlu0
      %v308 = vpop.trf.xlu0
      %v309 = vpop.trf.xlu0
      %v310 = vpop.trf.xlu0
      %v311 = vpop.trf.xlu0
      %v312 = vpop.trf.xlu0
      %v313 = vpop.trf.xlu0
      %v314 = vpop.trf.xlu0
      %v315 = vpop.trf.xlu0
      %v316 = vpop.trf.xlu0
      %v317 = vpop.trf.xlu0
      %v318 = vpop.trf.xlu0
      %v319 = vld [vmem:[%s2] sm:$0xff]
      %v320 = vld [vmem:[%s2 + $0x8] sm:$0xff]
      %v321 = vld [vmem:[%s3] sm:$0x1]
      %v323 = vlaneseq
      %v324 = vshrl.u32 %v323, 7
      %v325 = vsub.s32 0, %v324
      %v326 = vrot.slane %v321, %v325
      %vm328 = vcmask 130048
      %v330 = vsel %vm328, %v303, 0
      %v333 = vsel %vm328, %v304, 0
      %v336 = vsel %vm328, %v305, 0
      %v339 = vsel %vm328, %v306, 0
      %v342 = vsel %vm328, %v307, 0
      %v345 = vsel %vm328, %v308, 0
      %v348 = vsel %vm328, %v309, 0
      %v351 = vsel %vm328, %v310, 0
      %353 = vmatprep.subr.mxu0 0.0
      %354 = vmatpush1.msra.mxu0 0.0
      %355 = vmatprep.subr.mxu0 0.0
      %356 = vmatpush1.msra.mxu0 0.0
      %357 = vmatprep.subr.mxu0 0.0
      %358 = vmatpush1.msra.mxu0 0.0
      %359 = vmatprep.subr.mxu0 0.0
      %360 = vmatpush1.msra.mxu0 0.0
      %361 = vmatprep.subr.mxu0 0.0
      %362 = vmatpush1.msra.mxu0 0.0
      %363 = vmatprep.subr.mxu0 0.0
      %364 = vmatpush1.msra.mxu0 0.0
      %365 = vmatprep.subr.mxu0 0.0
      %366 = vmatpush1.msra.mxu0 0.0
      %367 = vmatprep.subr.mxu0 0.0
      %368 = vmatpush1.msra.mxu0 0.0
      %369 = vmatprep.subr.mxu0 0.0
      %370 = vmatpush1.msra.mxu0 0.0
      %371 = vmatprep.subr.mxu0 0.0
      %372 = vmatpush1.msra.mxu0 0.0
      %373 = vmatprep.subr.mxu0 0.0
      %374 = vmatpush1.msra.mxu0 0.0
      %375 = vmatprep.subr.mxu0 0.0
      %376 = vmatpush1.msra.mxu0 0.0
      %377 = vmatprep.subr.mxu0 0.0
      %378 = vmatpush1.msra.mxu0 0.0
      %379 = vmatprep.subr.mxu0 0.0
      %380 = vmatpush1.msra.mxu0 0.0
      %381 = vmatprep.subr.mxu0 0.0
      %382 = vmatpush1.msra.mxu0 %v320
      %383 = vmatprep.subr.mxu0 0.0
      %384 = vmatpush1.msra.mxu0 %v319
      %385 = vmatprep.subr.mxu0 0.0
      %386 = vmatpush2.msra.mxu0 0.0
      %387 = vmatprep.subr.mxu0 0.0
      %388 = vmatpush2.msra.mxu0 0.0
      %389 = vmatprep.subr.mxu0 0.0
      %390 = vmatpush2.msra.mxu0 0.0
      %391 = vmatprep.subr.mxu0 0.0
      %392 = vmatpush2.msra.mxu0 0.0
      %393 = vmatprep.subr.mxu0 0.0
      %394 = vmatpush2.msra.mxu0 0.0
      %395 = vmatprep.subr.mxu0 0.0
      %396 = vmatpush2.msra.mxu0 0.0
      %397 = vmatprep.subr.mxu0 0.0
      %398 = vmatpush2.msra.mxu0 0.0
      %399 = vmatprep.subr.mxu0 0.0
      %400 = vmatpush2.msra.mxu0 0.0
      %401 = vmatprep.subr.mxu0 0.0
      %402 = vmatpush2.msra.mxu0 0.0
      %403 = vmatprep.subr.mxu0 0.0
      %404 = vmatpush2.msra.mxu0 0.0
      %405 = vmatprep.subr.mxu0 0.0
      %406 = vmatpush2.msra.mxu0 0.0
      %407 = vmatprep.subr.mxu0 0.0
      %408 = vmatpush2.msra.mxu0 0.0
      %409 = vmatprep.subr.mxu0 0.0
      %410 = vmatpush2.msra.mxu0 0.0
      %411 = vmatprep.subr.mxu0 0.0
      %412 = vmatpush2.msra.mxu0 0.0
      %413 = vmatprep.subr.mxu0 0.0
      %414 = vmatpush2.msra.mxu0 0.0
      %415 = vmatprep.subr.mxu0 0.0
      %416 = vmatpush2.msra.mxu0 0.0
      %417 = vmatprep.mubr.f32.mxu0 0.0
      %418 = vmatmul.mubr.f32.gmra.mxu0 %v330
      %v419 = vpop.f32.mrf.mxu0
      %v420 = vadd.f32 %v326, %v419
      %v421 = vpop.f32.mrf.mxu0
      %422 = vmatprep.mubr.f32.mxu0 0.0
      %423 = vmatmul.mubr.f32.gmra.mxu0 %v333
      %v424 = vpop.f32.mrf.mxu0
      %v425 = vadd.f32 %v326, %v424
      %v426 = vpop.f32.mrf.mxu0
      %427 = vmatprep.mubr.f32.mxu0 0.0
      %428 = vmatmul.mubr.f32.gmra.mxu0 %v336
      %v429 = vpop.f32.mrf.mxu0
      %v430 = vadd.f32 %v326, %v429
      %v431 = vpop.f32.mrf.mxu0
      %432 = vmatprep.mubr.f32.mxu0 0.0
      %433 = vmatmul.mubr.f32.gmra.mxu0 %v339
      %v434 = vpop.f32.mrf.mxu0
      %v435 = vadd.f32 %v326, %v434
      %v436 = vpop.f32.mrf.mxu0
      %437 = vmatprep.mubr.f32.mxu0 0.0
      %438 = vmatmul.mubr.f32.gmra.mxu0 %v342
      %v439 = vpop.f32.mrf.mxu0
      %v440 = vadd.f32 %v326, %v439
      %v441 = vpop.f32.mrf.mxu0
      %442 = vmatprep.mubr.f32.mxu0 0.0
      %443 = vmatmul.mubr.f32.gmra.mxu0 %v345
      %v444 = vpop.f32.mrf.mxu0
      %v445 = vadd.f32 %v326, %v444
      %v446 = vpop.f32.mrf.mxu0
      %447 = vmatprep.mubr.f32.mxu0 0.0
      %448 = vmatmul.mubr.f32.gmra.mxu0 %v348
      %v449 = vpop.f32.mrf.mxu0
      %v450 = vadd.f32 %v326, %v449
      %v451 = vpop.f32.mrf.mxu0
      %452 = vmatprep.mubr.f32.mxu0 0.0
      %453 = vmatmul.mubr.f32.gmra.mxu0 %v351
      %v454 = vpop.f32.mrf.mxu0
      %v455 = vadd.f32 %v326, %v454
      %v456 = vpop.f32.mrf.mxu0
      %457 = vdwg.mxu0
      %v458 = vld [vmem:[%s4] sm:$0xff]
      %v459 = vld [vmem:[%s4 + $0x8] sm:$0xff]
      %v460 = vld [vmem:[%s5] sm:$0x1]
      %v462 = vlaneseq
      %v463 = vshrl.u32 %v462, 7
      %v464 = vsub.s32 0, %v463
      %v465 = vrot.slane %v460, %v464
      %467 = vmatprep.subr.mxu0 0.0
      %468 = vmatpush1.msra.mxu0 0.0
      %469 = vmatprep.subr.mxu0 0.0
      %470 = vmatpush1.msra.mxu0 0.0
      %471 = vmatprep.subr.mxu0 0.0
      %472 = vmatpush1.msra.mxu0 0.0
      %473 = vmatprep.subr.mxu0 0.0
      %474 = vmatpush1.msra.mxu0 0.0
      %475 = vmatprep.subr.mxu0 0.0
      %476 = vmatpush1.msra.mxu0 0.0
      %477 = vmatprep.subr.mxu0 0.0
      %478 = vmatpush1.msra.mxu0 0.0
      %479 = vmatprep.subr.mxu0 0.0
      %480 = vmatpush1.msra.mxu0 0.0
      %481 = vmatprep.subr.mxu0 0.0
      %482 = vmatpush1.msra.mxu0 0.0
      %483 = vmatprep.subr.mxu0 0.0
      %484 = vmatpush1.msra.mxu0 0.0
      %485 = vmatprep.subr.mxu0 0.0
      %486 = vmatpush1.msra.mxu0 0.0
      %487 = vmatprep.subr.mxu0 0.0
      %488 = vmatpush1.msra.mxu0 0.0
      %489 = vmatprep.subr.mxu0 0.0
      %490 = vmatpush1.msra.mxu0 0.0
      %491 = vmatprep.subr.mxu0 0.0
      %492 = vmatpush1.msra.mxu0 0.0
      %493 = vmatprep.subr.mxu0 0.0
      %494 = vmatpush1.msra.mxu0 0.0
      %495 = vmatprep.subr.mxu0 0.0
      %496 = vmatpush1.msra.mxu0 %v459
      %497 = vmatprep.subr.mxu0 0.0
      %498 = vmatpush1.msra.mxu0 %v458
      %499 = vmatprep.subr.mxu0 0.0
      %500 = vmatpush2.msra.mxu0 0.0
      %501 = vmatprep.subr.mxu0 0.0
      %502 = vmatpush2.msra.mxu0 0.0
      %503 = vmatprep.subr.mxu0 0.0
      %504 = vmatpush2.msra.mxu0 0.0
      %505 = vmatprep.subr.mxu0 0.0
      %506 = vmatpush2.msra.mxu0 0.0
      %507 = vmatprep.subr.mxu0 0.0
      %508 = vmatpush2.msra.mxu0 0.0
      %509 = vmatprep.subr.mxu0 0.0
      %510 = vmatpush2.msra.mxu0 0.0
      %511 = vmatprep.subr.mxu0 0.0
      %512 = vmatpush2.msra.mxu0 0.0
      %513 = vmatprep.subr.mxu0 0.0
      %514 = vmatpush2.msra.mxu0 0.0
      %515 = vmatprep.subr.mxu0 0.0
      %516 = vmatpush2.msra.mxu0 0.0
      %517 = vmatprep.subr.mxu0 0.0
      %518 = vmatpush2.msra.mxu0 0.0
      %519 = vmatprep.subr.mxu0 0.0
      %520 = vmatpush2.msra.mxu0 0.0
      %521 = vmatprep.subr.mxu0 0.0
      %522 = vmatpush2.msra.mxu0 0.0
      %523 = vmatprep.subr.mxu0 0.0
      %524 = vmatpush2.msra.mxu0 0.0
      %525 = vmatprep.subr.mxu0 0.0
      %526 = vmatpush2.msra.mxu0 0.0
      %527 = vmatprep.subr.mxu0 0.0
      %528 = vmatpush2.msra.mxu0 0.0
      %529 = vmatprep.subr.mxu0 0.0
      %530 = vmatpush2.msra.mxu0 0.0
      %531 = vmatprep.mubr.f32.mxu0 0.0
      %532 = vmatmul.mubr.f32.gmra.mxu0 %v330
      %v533 = vpop.f32.mrf.mxu0
      %v534 = vadd.f32 %v465, %v533
      %v535 = vpop.f32.mrf.mxu0
      %536 = vmatprep.mubr.f32.mxu0 0.0
      %537 = vmatmul.mubr.f32.gmra.mxu0 %v333
      %v538 = vpop.f32.mrf.mxu0
      %v539 = vadd.f32 %v465, %v538
      %v540 = vpop.f32.mrf.mxu0
      %541 = vmatprep.mubr.f32.mxu0 0.0
      %542 = vmatmul.mubr.f32.gmra.mxu0 %v336
      %v543 = vpop.f32.mrf.mxu0
      %v544 = vadd.f32 %v465, %v543
      %v545 = vpop.f32.mrf.mxu0
      %546 = vmatprep.mubr.f32.mxu0 0.0
      %547 = vmatmul.mubr.f32.gmra.mxu0 %v339
      %v548 = vpop.f32.mrf.mxu0
      %v549 = vadd.f32 %v465, %v548
      %v550 = vpop.f32.mrf.mxu0
      %551 = vmatprep.mubr.f32.mxu0 0.0
      %552 = vmatmul.mubr.f32.gmra.mxu0 %v342
      %v553 = vpop.f32.mrf.mxu0
      %v554 = vadd.f32 %v465, %v553
      %v555 = vpop.f32.mrf.mxu0
      %556 = vmatprep.mubr.f32.mxu0 0.0
      %557 = vmatmul.mubr.f32.gmra.mxu0 %v345
      %v558 = vpop.f32.mrf.mxu0
      %v559 = vadd.f32 %v465, %v558
      %v560 = vpop.f32.mrf.mxu0
      %561 = vmatprep.mubr.f32.mxu0 0.0
      %562 = vmatmul.mubr.f32.gmra.mxu0 %v348
      %v563 = vpop.f32.mrf.mxu0
      %v564 = vadd.f32 %v465, %v563
      %v565 = vpop.f32.mrf.mxu0
      %566 = vmatprep.mubr.f32.mxu0 0.0
      %567 = vmatmul.mubr.f32.gmra.mxu0 %v351
      %v568 = vpop.f32.mrf.mxu0
      %v569 = vadd.f32 %v465, %v568
      %v570 = vpop.f32.mrf.mxu0
      %571 = vdwg.mxu0
      %v573 = vsel %vm328, %v534, 0
      %v576 = vsel %vm328, %v539, 0
      %v579 = vsel %vm328, %v544, 0
      %v582 = vsel %vm328, %v549, 0
      %v585 = vsel %vm328, %v554, 0
      %v588 = vsel %vm328, %v559, 0
      %v591 = vsel %vm328, %v564, 0
      %v594 = vsel %vm328, %v569, 0
      %596 = vmatprep.subr.mxu0 0.0
      %597 = vmatpush1.msra.mxu0 0.0
      %598 = vmatprep.subr.mxu0 0.0
      %599 = vmatpush1.msra.mxu0 0.0
      %600 = vmatprep.subr.mxu0 0.0
      %601 = vmatpush1.msra.mxu0 0.0
      %602 = vmatprep.subr.mxu0 0.0
      %603 = vmatpush1.msra.mxu0 0.0
      %604 = vmatprep.subr.mxu0 0.0
      %605 = vmatpush1.msra.mxu0 0.0
      %606 = vmatprep.subr.mxu0 0.0
      %607 = vmatpush1.msra.mxu0 0.0
      %608 = vmatprep.subr.mxu0 0.0
      %609 = vmatpush1.msra.mxu0 0.0
      %610 = vmatprep.subr.mxu0 0.0
      %611 = vmatpush1.msra.mxu0 0.0
      %612 = vmatprep.subr.mxu0 0.0
      %613 = vmatpush1.msra.mxu0 0.0
      %614 = vmatprep.subr.mxu0 0.0
      %615 = vmatpush1.msra.mxu0 0.0
      %616 = vmatprep.subr.mxu0 0.0
      %617 = vmatpush1.msra.mxu0 0.0
      %618 = vmatprep.subr.mxu0 0.0
      %619 = vmatpush1.msra.mxu0 0.0
      %620 = vmatprep.subr.mxu0 0.0
      %621 = vmatpush1.msra.mxu0 0.0
      %622 = vmatprep.subr.mxu0 0.0
      %623 = vmatpush1.msra.mxu0 0.0
      %624 = vmatprep.subr.mxu0 0.0
      %625 = vmatpush1.msra.mxu0 %v286
      %626 = vmatprep.subr.mxu0 0.0
      %627 = vmatpush1.msra.mxu0 %v285
      %628 = vmatprep.subr.mxu0 0.0
      %629 = vmatpush2.msra.mxu0 0.0
      %630 = vmatprep.subr.mxu0 0.0
      %631 = vmatpush2.msra.mxu0 0.0
      %632 = vmatprep.subr.mxu0 0.0
      %633 = vmatpush2.msra.mxu0 0.0
      %634 = vmatprep.subr.mxu0 0.0
      %635 = vmatpush2.msra.mxu0 0.0
      %636 = vmatprep.subr.mxu0 0.0
      %637 = vmatpush2.msra.mxu0 0.0
      %638 = vmatprep.subr.mxu0 0.0
      %639 = vmatpush2.msra.mxu0 0.0
      %640 = vmatprep.subr.mxu0 0.0
      %641 = vmatpush2.msra.mxu0 0.0
      %642 = vmatprep.subr.mxu0 0.0
      %643 = vmatpush2.msra.mxu0 0.0
      %644 = vmatprep.subr.mxu0 0.0
      %645 = vmatpush2.msra.mxu0 0.0
      %646 = vmatprep.subr.mxu0 0.0
      %647 = vmatpush2.msra.mxu0 0.0
      %648 = vmatprep.subr.mxu0 0.0
      %649 = vmatpush2.msra.mxu0 0.0
      %650 = vmatprep.subr.mxu0 0.0
      %651 = vmatpush2.msra.mxu0 0.0
      %652 = vmatprep.subr.mxu0 0.0
      %653 = vmatpush2.msra.mxu0 0.0
      %654 = vmatprep.subr.mxu0 0.0
      %655 = vmatpush2.msra.mxu0 0.0
      %656 = vmatprep.subr.mxu0 0.0
      %657 = vmatpush2.msra.mxu0 0.0
      %658 = vmatprep.subr.mxu0 0.0
      %659 = vmatpush2.msra.mxu0 0.0
      %660 = vmatprep.mubr.f32.mxu0 0.0
      %661 = vmatmul.mubr.f32.gmra.mxu0 %v573
      %v662 = vpop.f32.mrf.mxu0
      %v663 = vadd.f32 0.0, %v662
      %v664 = vpop.f32.mrf.mxu0
      %665 = vmatprep.mubr.f32.mxu0 0.0
      %666 = vmatmul.mubr.f32.gmra.mxu0 %v576
      %v667 = vpop.f32.mrf.mxu0
      %v668 = vadd.f32 0.0, %v667
      %v669 = vpop.f32.mrf.mxu0
      %670 = vmatprep.mubr.f32.mxu0 0.0
      %671 = vmatmul.mubr.f32.gmra.mxu0 %v579
      %v672 = vpop.f32.mrf.mxu0
      %v673 = vadd.f32 0.0, %v672
      %v674 = vpop.f32.mrf.mxu0
      %675 = vmatprep.mubr.f32.mxu0 0.0
      %676 = vmatmul.mubr.f32.gmra.mxu0 %v582
      %v677 = vpop.f32.mrf.mxu0
      %v678 = vadd.f32 0.0, %v677
      %v679 = vpop.f32.mrf.mxu0
      %680 = vmatprep.mubr.f32.mxu0 0.0
      %681 = vmatmul.mubr.f32.gmra.mxu0 %v585
      %v682 = vpop.f32.mrf.mxu0
      %v683 = vadd.f32 0.0, %v682
      %v684 = vpop.f32.mrf.mxu0
      %685 = vmatprep.mubr.f32.mxu0 0.0
      %686 = vmatmul.mubr.f32.gmra.mxu0 %v588
      %v687 = vpop.f32.mrf.mxu0
      %v688 = vadd.f32 0.0, %v687
      %v689 = vpop.f32.mrf.mxu0
      %690 = vmatprep.mubr.f32.mxu0 0.0
      %691 = vmatmul.mubr.f32.gmra.mxu0 %v591
      %v692 = vpop.f32.mrf.mxu0
      %v693 = vadd.f32 0.0, %v692
      %v694 = vpop.f32.mrf.mxu0
      %695 = vmatprep.mubr.f32.mxu0 0.0
      %696 = vmatmul.mubr.f32.gmra.mxu0 %v594
      %v697 = vpop.f32.mrf.mxu0
      %v698 = vadd.f32 0.0, %v697
      %v699 = vpop.f32.mrf.mxu0
      %700 = vdwg.mxu0
      %vm701 = vcmask 523264
      %v702 = vsel %vm701, %v663, -inf
      %703 = vmax.xlane.f32.xlu0 %v702
      %v704 = vpop.xlane.xlu0 %703
      %v705 = vsel %vm701, %v668, -inf
      %706 = vmax.xlane.f32.xlu0 %v705
      %v707 = vpop.xlane.xlu0 %706
      %v708 = vsel %vm701, %v673, -inf
      %709 = vmax.xlane.f32.xlu0 %v708
      %v710 = vpop.xlane.xlu0 %709
      %v711 = vsel %vm701, %v678, -inf
      %712 = vmax.xlane.f32.xlu0 %v711
      %v713 = vpop.xlane.xlu0 %712
      %v714 = vsel %vm701, %v683, -inf
      %715 = vmax.xlane.f32.xlu0 %v714
      %v716 = vpop.xlane.xlu0 %715
      %v717 = vsel %vm701, %v688, -inf
      %718 = vmax.xlane.f32.xlu0 %v717
      %v719 = vpop.xlane.xlu0 %718
      %v720 = vsel %vm701, %v693, -inf
      %721 = vmax.xlane.f32.xlu0 %v720
      %v722 = vpop.xlane.xlu0 %721
      %v723 = vsel %vm701, %v698, -inf
      %724 = vmax.xlane.f32.xlu0 %v723
      %v725 = vpop.xlane.xlu0 %724
      %v726 = vsub.f32 %v663, %v704
      %v727 = vsub.f32 %v668, %v707
      %v728 = vsub.f32 %v673, %v710
      %v729 = vsub.f32 %v678, %v713
      %v730 = vsub.f32 %v683, %v716
      %v731 = vsub.f32 %v688, %v719
      %v732 = vsub.f32 %v693, %v722
      %v733 = vsub.f32 %v698, %v725
      %v734 = vmul.f32 %v726, 1.442695
      %v735 = vpow.pop %v734
      %v736 = vmul.f32 %v727, 1.442695
      %v737 = vpow.pop %v736
      %v738 = vmul.f32 %v728, 1.442695
      %v739 = vpow.pop %v738
      %v740 = vmul.f32 %v729, 1.442695
      %v741 = vpow.pop %v740
      %v742 = vmul.f32 %v730, 1.442695
      %v743 = vpow.pop %v742
      %v744 = vmul.f32 %v731, 1.442695
      %v745 = vpow.pop %v744
      %v746 = vmul.f32 %v732, 1.442695
      %v747 = vpow.pop %v746
      %v748 = vmul.f32 %v733, 1.442695
      %v749 = vpow.pop %v748
      %v750 = vsel %vm701, %v735, 0.0
      %751 = vadd.xlane.f32.xlu0 %v750
      %v752 = vpop.xlane.xlu0 %751
      %v753 = vsel %vm701, %v737, 0.0
      %754 = vadd.xlane.f32.xlu0 %v753
      %v755 = vpop.xlane.xlu0 %754
      %v756 = vsel %vm701, %v739, 0.0
      %757 = vadd.xlane.f32.xlu0 %v756
      %v758 = vpop.xlane.xlu0 %757
      %v759 = vsel %vm701, %v741, 0.0
      %760 = vadd.xlane.f32.xlu0 %v759
      %v761 = vpop.xlane.xlu0 %760
      %v762 = vsel %vm701, %v743, 0.0
      %763 = vadd.xlane.f32.xlu0 %v762
      %v764 = vpop.xlane.xlu0 %763
      %v765 = vsel %vm701, %v745, 0.0
      %766 = vadd.xlane.f32.xlu0 %v765
      %v767 = vpop.xlane.xlu0 %766
      %v768 = vsel %vm701, %v747, 0.0
      %769 = vadd.xlane.f32.xlu0 %v768
      %v770 = vpop.xlane.xlu0 %769
      %v771 = vsel %vm701, %v749, 0.0
      %772 = vadd.xlane.f32.xlu0 %v771
      %v773 = vpop.xlane.xlu0 %772
      %v774 = vrcp.pop %v752
      %v775 = vrcp.pop %v755
      %v776 = vrcp.pop %v758
      %v777 = vrcp.pop %v761
      %v778 = vrcp.pop %v764
      %v779 = vrcp.pop %v767
      %v780 = vrcp.pop %v770
      %v781 = vrcp.pop %v773
      %v782 = vmul.f32 %v735, %v774
      %v783 = vmul.f32 %v737, %v775
      %v784 = vmul.f32 %v739, %v776
      %v785 = vmul.f32 %v741, %v777
      %v786 = vmul.f32 %v743, %v778
      %v787 = vmul.f32 %v745, %v779
      %v788 = vmul.f32 %v747, %v780
      %v789 = vmul.f32 %v749, %v781
      %v790 = vld [vmem:[%s276] sm:$0xff]
      %v791 = vld [vmem:[%s276 + $0x8] sm:$0xff]
      %v792 = vld [vmem:[%s276 + $0x10] sm:$0xff]
      %v793 = vld [vmem:[%s276 + $0x18] sm:$0xff]
      %v794 = vld [vmem:[%s276 + $0x20] sm:$0xff]
      %v795 = vld [vmem:[%s276 + $0x28] sm:$0xff]
      %v796 = vld [vmem:[%s276 + $0x30] sm:$0xff]
      %v797 = vld [vmem:[%s276 + $0x38] sm:$0xff]
      %v799 = vsel %vm701, %v782, 0
      %v802 = vsel %vm701, %v783, 0
      %v805 = vsel %vm701, %v784, 0
      %v808 = vsel %vm701, %v785, 0
      %v811 = vsel %vm701, %v786, 0
      %v814 = vsel %vm701, %v787, 0
      %v817 = vsel %vm701, %v788, 0
      %v820 = vsel %vm701, %v789, 0
      %822 = vmatprep.subr.mxu0 0.0
      %823 = vmatpush1.msra.mxu0 0.0
      %824 = vmatprep.subr.mxu0 0.0
      %825 = vmatpush1.msra.mxu0 0.0
      %826 = vmatprep.subr.mxu0 0.0
      %827 = vmatpush1.msra.mxu0 0.0
      %828 = vmatprep.subr.mxu0 0.0
      %829 = vmatpush1.msra.mxu0 0.0
      %830 = vmatprep.subr.mxu0 0.0
      %831 = vmatpush1.msra.mxu0 0.0
      %832 = vmatprep.subr.mxu0 0.0
      %833 = vmatpush1.msra.mxu0 0.0
      %834 = vmatprep.subr.mxu0 0.0
      %835 = vmatpush1.msra.mxu0 0.0
      %836 = vmatprep.subr.mxu0 0.0
      %837 = vmatpush1.msra.mxu0 0.0
      %838 = vmatprep.subr.mxu0 0.0
      %839 = vmatpush1.msra.mxu0 %v455
      %840 = vmatprep.subr.mxu0 0.0
      %841 = vmatpush1.msra.mxu0 %v450
      %842 = vmatprep.subr.mxu0 0.0
      %843 = vmatpush1.msra.mxu0 %v445
      %844 = vmatprep.subr.mxu0 0.0
      %845 = vmatpush1.msra.mxu0 %v440
      %846 = vmatprep.subr.mxu0 0.0
      %847 = vmatpush1.msra.mxu0 %v435
      %848 = vmatprep.subr.mxu0 0.0
      %849 = vmatpush1.msra.mxu0 %v430
      %850 = vmatprep.subr.mxu0 0.0
      %851 = vmatpush1.msra.mxu0 %v425
      %852 = vmatprep.subr.mxu0 0.0
      %853 = vmatpush1.msra.mxu0 %v420
      %854 = vmatprep.subr.mxu0 0.0
      %855 = vmatpush2.msra.mxu0 0.0
      %856 = vmatprep.subr.mxu0 0.0
      %857 = vmatpush2.msra.mxu0 0.0
      %858 = vmatprep.subr.mxu0 0.0
      %859 = vmatpush2.msra.mxu0 0.0
      %860 = vmatprep.subr.mxu0 0.0
      %861 = vmatpush2.msra.mxu0 0.0
      %862 = vmatprep.subr.mxu0 0.0
      %863 = vmatpush2.msra.mxu0 0.0
      %864 = vmatprep.subr.mxu0 0.0
      %865 = vmatpush2.msra.mxu0 0.0
      %866 = vmatprep.subr.mxu0 0.0
      %867 = vmatpush2.msra.mxu0 0.0
      %868 = vmatprep.subr.mxu0 0.0
      %869 = vmatpush2.msra.mxu0 0.0
      %870 = vmatprep.subr.mxu0 0.0
      %871 = vmatpush2.msra.mxu0 0.0
      %872 = vmatprep.subr.mxu0 0.0
      %873 = vmatpush2.msra.mxu0 0.0
      %874 = vmatprep.subr.mxu0 0.0
      %875 = vmatpush2.msra.mxu0 0.0
      %876 = vmatprep.subr.mxu0 0.0
      %877 = vmatpush2.msra.mxu0 0.0
      %878 = vmatprep.subr.mxu0 0.0
      %879 = vmatpush2.msra.mxu0 0.0
      %880 = vmatprep.subr.mxu0 0.0
      %881 = vmatpush2.msra.mxu0 0.0
      %882 = vmatprep.subr.mxu0 0.0
      %883 = vmatpush2.msra.mxu0 0.0
      %884 = vmatprep.subr.mxu0 0.0
      %885 = vmatpush2.msra.mxu0 0.0
      %886 = vmatprep.mubr.f32.mxu0 0.0
      %887 = vmatmul.mubr.f32.gmra.mxu0 %v799
      %v888 = vpop.f32.mrf.mxu0
      %v889 = vadd.f32 %v790, %v888
      %v890 = vpop.f32.mrf.mxu0
      %891 = vmatprep.mubr.f32.mxu0 0.0
      %892 = vmatmul.mubr.f32.gmra.mxu0 %v802
      %v893 = vpop.f32.mrf.mxu0
      %v894 = vadd.f32 %v791, %v893
      %v895 = vpop.f32.mrf.mxu0
      %896 = vmatprep.mubr.f32.mxu0 0.0
      %897 = vmatmul.mubr.f32.gmra.mxu0 %v805
      %v898 = vpop.f32.mrf.mxu0
      %v899 = vadd.f32 %v792, %v898
      %v900 = vpop.f32.mrf.mxu0
      %901 = vmatprep.mubr.f32.mxu0 0.0
      %902 = vmatmul.mubr.f32.gmra.mxu0 %v808
      %v903 = vpop.f32.mrf.mxu0
      %v904 = vadd.f32 %v793, %v903
      %v905 = vpop.f32.mrf.mxu0
      %906 = vmatprep.mubr.f32.mxu0 0.0
      %907 = vmatmul.mubr.f32.gmra.mxu0 %v811
      %v908 = vpop.f32.mrf.mxu0
      %v909 = vadd.f32 %v794, %v908
      %v910 = vpop.f32.mrf.mxu0
      %911 = vmatprep.mubr.f32.mxu0 0.0
      %912 = vmatmul.mubr.f32.gmra.mxu0 %v814
      %v913 = vpop.f32.mrf.mxu0
      %v914 = vadd.f32 %v795, %v913
      %v915 = vpop.f32.mrf.mxu0
      %916 = vmatprep.mubr.f32.mxu0 0.0
      %917 = vmatmul.mubr.f32.gmra.mxu0 %v817
      %v918 = vpop.f32.mrf.mxu0
      %v919 = vadd.f32 %v796, %v918
      %v920 = vpop.f32.mrf.mxu0
      %921 = vmatprep.mubr.f32.mxu0 0.0
      %922 = vmatmul.mubr.f32.gmra.mxu0 %v820
      %v923 = vpop.f32.mrf.mxu0
      %v924 = vadd.f32 %v797, %v923
      %v925 = vpop.f32.mrf.mxu0
      %926 = vdwg.mxu0
      %927 = vst.msk [vmem:[%s283] sm:$0xff] %vm328, %v889
      %928 = vst.msk [vmem:[%s283 + $0x8] sm:$0xff] %vm328, %v894
      %929 = vst.msk [vmem:[%s283 + $0x10] sm:$0xff] %vm328, %v899
      %930 = vst.msk [vmem:[%s283 + $0x18] sm:$0xff] %vm328, %v904
      %931 = vst.msk [vmem:[%s283 + $0x20] sm:$0xff] %vm328, %v909
      %932 = vst.msk [vmem:[%s283 + $0x28] sm:$0xff] %vm328, %v914
      %933 = vst.msk [vmem:[%s283 + $0x30] sm:$0xff] %vm328, %v919
      %934 = vst.msk [vmem:[%s283 + $0x38] sm:$0xff] %vm328, %v924
      %s935 = scalar_lea.vmem %s269, 16
      %v936 = vld [vmem:[%s935] sm:$0xff]
      %v937 = vld [vmem:[%s935 + $0x8] sm:$0xff]
      %938 = vxpose.xlu0.b32.start [1/16] %v936, 128
      %939 = vxpose.xlu0.b32.cont [2/16] %v937, 128
      %940 = vxpose.xlu0.b32.cont [3/16] 0.0, 128
      %941 = vxpose.xlu0.b32.cont [4/16] 0.0, 128
      %942 = vxpose.xlu0.b32.cont [5/16] 0.0, 128
      %943 = vxpose.xlu0.b32.cont [6/16] 0.0, 128
      %944 = vxpose.xlu0.b32.cont [7/16] 0.0, 128
      %945 = vxpose.xlu0.b32.cont [8/16] 0.0, 128
      %946 = vxpose.xlu0.b32.cont [9/16] 0.0, 128
      %947 = vxpose.xlu0.b32.cont [10/16] 0.0, 128
      %948 = vxpose.xlu0.b32.cont [11/16] 0.0, 128
      %949 = vxpose.xlu0.b32.cont [12/16] 0.0, 128
      %950 = vxpose.xlu0.b32.cont [13/16] 0.0, 128
      %951 = vxpose.xlu0.b32.cont [14/16] 0.0, 128
      %952 = vxpose.xlu0.b32.cont [15/16] 0.0, 128
      %953 = vxpose.xlu0.b32.end [16/16] 0.0, 128
      %v954 = vpop.trf.xlu0
      %v955 = vpop.trf.xlu0
      %v956 = vpop.trf.xlu0
      %v957 = vpop.trf.xlu0
      %v958 = vpop.trf.xlu0
      %v959 = vpop.trf.xlu0
      %v960 = vpop.trf.xlu0
      %v961 = vpop.trf.xlu0
      %v962 = vpop.trf.xlu0
      %v963 = vpop.trf.xlu0
      %v964 = vpop.trf.xlu0
      %v965 = vpop.trf.xlu0
      %v966 = vpop.trf.xlu0
      %v967 = vpop.trf.xlu0
      %v968 = vpop.trf.xlu0
      %v969 = vpop.trf.xlu0
      %v970 = vld [vmem:[%s2] sm:$0xff]
      %v971 = vld [vmem:[%s2 + $0x8] sm:$0xff]
      %v972 = vld [vmem:[%s3] sm:$0x1]
      %v974 = vlaneseq
      %v975 = vshrl.u32 %v974, 7
      %v976 = vsub.s32 0, %v975
      %v977 = vrot.slane %v972, %v976
      %v980 = vsel %vm328, %v954, 0
      %v983 = vsel %vm328, %v955, 0
      %v986 = vsel %vm328, %v956, 0
      %v989 = vsel %vm328, %v957, 0
      %v992 = vsel %vm328, %v958, 0
      %v995 = vsel %vm328, %v959, 0
      %v998 = vsel %vm328, %v960, 0
      %v1001 = vsel %vm328, %v961, 0
      %1003 = vmatprep.subr.mxu0 0.0
      %1004 = vmatpush1.msra.mxu0 0.0
      %1005 = vmatprep.subr.mxu0 0.0
      %1006 = vmatpush1.msra.mxu0 0.0
      %1007 = vmatprep.subr.mxu0 0.0
      %1008 = vmatpush1.msra.mxu0 0.0
      %1009 = vmatprep.subr.mxu0 0.0
      %1010 = vmatpush1.msra.mxu0 0.0
      %1011 = vmatprep.subr.mxu0 0.0
      %1012 = vmatpush1.msra.mxu0 0.0
      %1013 = vmatprep.subr.mxu0 0.0
      %1014 = vmatpush1.msra.mxu0 0.0
      %1015 = vmatprep.subr.mxu0 0.0
      %1016 = vmatpush1.msra.mxu0 0.0
      %1017 = vmatprep.subr.mxu0 0.0
      %1018 = vmatpush1.msra.mxu0 0.0
      %1019 = vmatprep.subr.mxu0 0.0
      %1020 = vmatpush1.msra.mxu0 0.0
      %1021 = vmatprep.subr.mxu0 0.0
      %1022 = vmatpush1.msra.mxu0 0.0
      %1023 = vmatprep.subr.mxu0 0.0
      %1024 = vmatpush1.msra.mxu0 0.0
      %1025 = vmatprep.subr.mxu0 0.0
      %1026 = vmatpush1.msra.mxu0 0.0
      %1027 = vmatprep.subr.mxu0 0.0
      %1028 = vmatpush1.msra.mxu0 0.0
      %1029 = vmatprep.subr.mxu0 0.0
      %1030 = vmatpush1.msra.mxu0 0.0
      %1031 = vmatprep.subr.mxu0 0.0
      %1032 = vmatpush1.msra.mxu0 %v971
      %1033 = vmatprep.subr.mxu0 0.0
      %1034 = vmatpush1.msra.mxu0 %v970
      %1035 = vmatprep.subr.mxu0 0.0
      %1036 = vmatpush2.msra.mxu0 0.0
      %1037 = vmatprep.subr.mxu0 0.0
      %1038 = vmatpush2.msra.mxu0 0.0
      %1039 = vmatprep.subr.mxu0 0.0
      %1040 = vmatpush2.msra.mxu0 0.0
      %1041 = vmatprep.subr.mxu0 0.0
      %1042 = vmatpush2.msra.mxu0 0.0
      %1043 = vmatprep.subr.mxu0 0.0
      %1044 = vmatpush2.msra.mxu0 0.0
      %1045 = vmatprep.subr.mxu0 0.0
      %1046 = vmatpush2.msra.mxu0 0.0
      %1047 = vmatprep.subr.mxu0 0.0
      %1048 = vmatpush2.msra.mxu0 0.0
      %1049 = vmatprep.subr.mxu0 0.0
      %1050 = vmatpush2.msra.mxu0 0.0
      %1051 = vmatprep.subr.mxu0 0.0
      %1052 = vmatpush2.msra.mxu0 0.0
      %1053 = vmatprep.subr.mxu0 0.0
      %1054 = vmatpush2.msra.mxu0 0.0
      %1055 = vmatprep.subr.mxu0 0.0
      %1056 = vmatpush2.msra.mxu0 0.0
      %1057 = vmatprep.subr.mxu0 0.0
      %1058 = vmatpush2.msra.mxu0 0.0
      %1059 = vmatprep.subr.mxu0 0.0
      %1060 = vmatpush2.msra.mxu0 0.0
      %1061 = vmatprep.subr.mxu0 0.0
      %1062 = vmatpush2.msra.mxu0 0.0
      %1063 = vmatprep.subr.mxu0 0.0
      %1064 = vmatpush2.msra.mxu0 0.0
      %1065 = vmatprep.subr.mxu0 0.0
      %1066 = vmatpush2.msra.mxu0 0.0
      %1067 = vmatprep.mubr.f32.mxu0 0.0
      %1068 = vmatmul.mubr.f32.gmra.mxu0 %v980
      %v1069 = vpop.f32.mrf.mxu0
      %v1070 = vadd.f32 %v977, %v1069
      %v1071 = vpop.f32.mrf.mxu0
      %1072 = vmatprep.mubr.f32.mxu0 0.0
      %1073 = vmatmul.mubr.f32.gmra.mxu0 %v983
      %v1074 = vpop.f32.mrf.mxu0
      %v1075 = vadd.f32 %v977, %v1074
      %v1076 = vpop.f32.mrf.mxu0
      %1077 = vmatprep.mubr.f32.mxu0 0.0
      %1078 = vmatmul.mubr.f32.gmra.mxu0 %v986
      %v1079 = vpop.f32.mrf.mxu0
      %v1080 = vadd.f32 %v977, %v1079
      %v1081 = vpop.f32.mrf.mxu0
      %1082 = vmatprep.mubr.f32.mxu0 0.0
      %1083 = vmatmul.mubr.f32.gmra.mxu0 %v989
      %v1084 = vpop.f32.mrf.mxu0
      %v1085 = vadd.f32 %v977, %v1084
      %v1086 = vpop.f32.mrf.mxu0
      %1087 = vmatprep.mubr.f32.mxu0 0.0
      %1088 = vmatmul.mubr.f32.gmra.mxu0 %v992
      %v1089 = vpop.f32.mrf.mxu0
      %v1090 = vadd.f32 %v977, %v1089
      %v1091 = vpop.f32.mrf.mxu0
      %1092 = vmatprep.mubr.f32.mxu0 0.0
      %1093 = vmatmul.mubr.f32.gmra.mxu0 %v995
      %v1094 = vpop.f32.mrf.mxu0
      %v1095 = vadd.f32 %v977, %v1094
      %v1096 = vpop.f32.mrf.mxu0
      %1097 = vmatprep.mubr.f32.mxu0 0.0
      %1098 = vmatmul.mubr.f32.gmra.mxu0 %v998
      %v1099 = vpop.f32.mrf.mxu0
      %v1100 = vadd.f32 %v977, %v1099
      %v1101 = vpop.f32.mrf.mxu0
      %1102 = vmatprep.mubr.f32.mxu0 0.0
      %1103 = vmatmul.mubr.f32.gmra.mxu0 %v1001
      %v1104 = vpop.f32.mrf.mxu0
      %v1105 = vadd.f32 %v977, %v1104
      %v1106 = vpop.f32.mrf.mxu0
      %1107 = vdwg.mxu0
      %v1108 = vld [vmem:[%s4] sm:$0xff]
      %v1109 = vld [vmem:[%s4 + $0x8] sm:$0xff]
      %v1110 = vld [vmem:[%s5] sm:$0x1]
      %v1112 = vlaneseq
      %v1113 = vshrl.u32 %v1112, 7
      %v1114 = vsub.s32 0, %v1113
      %v1115 = vrot.slane %v1110, %v1114
      %1117 = vmatprep.subr.mxu0 0.0
      %1118 = vmatpush1.msra.mxu0 0.0
      %1119 = vmatprep.subr.mxu0 0.0
      %1120 = vmatpush1.msra.mxu0 0.0
      %1121 = vmatprep.subr.mxu0 0.0
      %1122 = vmatpush1.msra.mxu0 0.0
      %1123 = vmatprep.subr.mxu0 0.0
      %1124 = vmatpush1.msra.mxu0 0.0
      %1125 = vmatprep.subr.mxu0 0.0
      %1126 = vmatpush1.msra.mxu0 0.0
      %1127 = vmatprep.subr.mxu0 0.0
      %1128 = vmatpush1.msra.mxu0 0.0
      %1129 = vmatprep.subr.mxu0 0.0
      %1130 = vmatpush1.msra.mxu0 0.0
      %1131 = vmatprep.subr.mxu0 0.0
      %1132 = vmatpush1.msra.mxu0 0.0
      %1133 = vmatprep.subr.mxu0 0.0
      %1134 = vmatpush1.msra.mxu0 0.0
      %1135 = vmatprep.subr.mxu0 0.0
      %1136 = vmatpush1.msra.mxu0 0.0
      %1137 = vmatprep.subr.mxu0 0.0
      %1138 = vmatpush1.msra.mxu0 0.0
      %1139 = vmatprep.subr.mxu0 0.0
      %1140 = vmatpush1.msra.mxu0 0.0
      %1141 = vmatprep.subr.mxu0 0.0
      %1142 = vmatpush1.msra.mxu0 0.0
      %1143 = vmatprep.subr.mxu0 0.0
      %1144 = vmatpush1.msra.mxu0 0.0
      %1145 = vmatprep.subr.mxu0 0.0
      %1146 = vmatpush1.msra.mxu0 %v1109
      %1147 = vmatprep.subr.mxu0 0.0
      %1148 = vmatpush1.msra.mxu0 %v1108
      %1149 = vmatprep.subr.mxu0 0.0
      %1150 = vmatpush2.msra.mxu0 0.0
      %1151 = vmatprep.subr.mxu0 0.0
      %1152 = vmatpush2.msra.mxu0 0.0
      %1153 = vmatprep.subr.mxu0 0.0
      %1154 = vmatpush2.msra.mxu0 0.0
      %1155 = vmatprep.subr.mxu0 0.0
      %1156 = vmatpush2.msra.mxu0 0.0
      %1157 = vmatprep.subr.mxu0 0.0
      %1158 = vmatpush2.msra.mxu0 0.0
      %1159 = vmatprep.subr.mxu0 0.0
      %1160 = vmatpush2.msra.mxu0 0.0
      %1161 = vmatprep.subr.mxu0 0.0
      %1162 = vmatpush2.msra.mxu0 0.0
      %1163 = vmatprep.subr.mxu0 0.0
      %1164 = vmatpush2.msra.mxu0 0.0
      %1165 = vmatprep.subr.mxu0 0.0
      %1166 = vmatpush2.msra.mxu0 0.0
      %1167 = vmatprep.subr.mxu0 0.0
      %1168 = vmatpush2.msra.mxu0 0.0
      %1169 = vmatprep.subr.mxu0 0.0
      %1170 = vmatpush2.msra.mxu0 0.0
      %1171 = vmatprep.subr.mxu0 0.0
      %1172 = vmatpush2.msra.mxu0 0.0
      %1173 = vmatprep.subr.mxu0 0.0
      %1174 = vmatpush2.msra.mxu0 0.0
      %1175 = vmatprep.subr.mxu0 0.0
      %1176 = vmatpush2.msra.mxu0 0.0
      %1177 = vmatprep.subr.mxu0 0.0
      %1178 = vmatpush2.msra.mxu0 0.0
      %1179 = vmatprep.subr.mxu0 0.0
      %1180 = vmatpush2.msra.mxu0 0.0
      %1181 = vmatprep.mubr.f32.mxu0 0.0
      %1182 = vmatmul.mubr.f32.gmra.mxu0 %v980
      %v1183 = vpop.f32.mrf.mxu0
      %v1184 = vadd.f32 %v1115, %v1183
      %v1185 = vpop.f32.mrf.mxu0
      %1186 = vmatprep.mubr.f32.mxu0 0.0
      %1187 = vmatmul.mubr.f32.gmra.mxu0 %v983
      %v1188 = vpop.f32.mrf.mxu0
      %v1189 = vadd.f32 %v1115, %v1188
      %v1190 = vpop.f32.mrf.mxu0
      %1191 = vmatprep.mubr.f32.mxu0 0.0
      %1192 = vmatmul.mubr.f32.gmra.mxu0 %v986
      %v1193 = vpop.f32.mrf.mxu0
      %v1194 = vadd.f32 %v1115, %v1193
      %v1195 = vpop.f32.mrf.mxu0
      %1196 = vmatprep.mubr.f32.mxu0 0.0
      %1197 = vmatmul.mubr.f32.gmra.mxu0 %v989
      %v1198 = vpop.f32.mrf.mxu0
      %v1199 = vadd.f32 %v1115, %v1198
      %v1200 = vpop.f32.mrf.mxu0
      %1201 = vmatprep.mubr.f32.mxu0 0.0
      %1202 = vmatmul.mubr.f32.gmra.mxu0 %v992
      %v1203 = vpop.f32.mrf.mxu0
      %v1204 = vadd.f32 %v1115, %v1203
      %v1205 = vpop.f32.mrf.mxu0
      %1206 = vmatprep.mubr.f32.mxu0 0.0
      %1207 = vmatmul.mubr.f32.gmra.mxu0 %v995
      %v1208 = vpop.f32.mrf.mxu0
      %v1209 = vadd.f32 %v1115, %v1208
      %v1210 = vpop.f32.mrf.mxu0
      %1211 = vmatprep.mubr.f32.mxu0 0.0
      %1212 = vmatmul.mubr.f32.gmra.mxu0 %v998
      %v1213 = vpop.f32.mrf.mxu0
      %v1214 = vadd.f32 %v1115, %v1213
      %v1215 = vpop.f32.mrf.mxu0
      %1216 = vmatprep.mubr.f32.mxu0 0.0
      %1217 = vmatmul.mubr.f32.gmra.mxu0 %v1001
      %v1218 = vpop.f32.mrf.mxu0
      %v1219 = vadd.f32 %v1115, %v1218
      %v1220 = vpop.f32.mrf.mxu0
      %1221 = vdwg.mxu0
      %v1223 = vsel %vm328, %v1184, 0
      %v1226 = vsel %vm328, %v1189, 0
      %v1229 = vsel %vm328, %v1194, 0
      %v1232 = vsel %vm328, %v1199, 0
      %v1235 = vsel %vm328, %v1204, 0
      %v1238 = vsel %vm328, %v1209, 0
      %v1241 = vsel %vm328, %v1214, 0
      %v1244 = vsel %vm328, %v1219, 0
      %1246 = vmatprep.subr.mxu0 0.0
      %1247 = vmatpush1.msra.mxu0 0.0
      %1248 = vmatprep.subr.mxu0 0.0
      %1249 = vmatpush1.msra.mxu0 0.0
      %1250 = vmatprep.subr.mxu0 0.0
      %1251 = vmatpush1.msra.mxu0 0.0
      %1252 = vmatprep.subr.mxu0 0.0
      %1253 = vmatpush1.msra.mxu0 0.0
      %1254 = vmatprep.subr.mxu0 0.0
      %1255 = vmatpush1.msra.mxu0 0.0
      %1256 = vmatprep.subr.mxu0 0.0
      %1257 = vmatpush1.msra.mxu0 0.0
      %1258 = vmatprep.subr.mxu0 0.0
      %1259 = vmatpush1.msra.mxu0 0.0
      %1260 = vmatprep.subr.mxu0 0.0
      %1261 = vmatpush1.msra.mxu0 0.0
      %1262 = vmatprep.subr.mxu0 0.0
      %1263 = vmatpush1.msra.mxu0 0.0
      %1264 = vmatprep.subr.mxu0 0.0
      %1265 = vmatpush1.msra.mxu0 0.0
      %1266 = vmatprep.subr.mxu0 0.0
      %1267 = vmatpush1.msra.mxu0 0.0
      %1268 = vmatprep.subr.mxu0 0.0
      %1269 = vmatpush1.msra.mxu0 0.0
      %1270 = vmatprep.subr.mxu0 0.0
      %1271 = vmatpush1.msra.mxu0 0.0
      %1272 = vmatprep.subr.mxu0 0.0
      %1273 = vmatpush1.msra.mxu0 0.0
      %1274 = vmatprep.subr.mxu0 0.0
      %1275 = vmatpush1.msra.mxu0 %v937
      %1276 = vmatprep.subr.mxu0 0.0
      %1277 = vmatpush1.msra.mxu0 %v936
      %1278 = vmatprep.subr.mxu0 0.0
      %1279 = vmatpush2.msra.mxu0 0.0
      %1280 = vmatprep.subr.mxu0 0.0
      %1281 = vmatpush2.msra.mxu0 0.0
      %1282 = vmatprep.subr.mxu0 0.0
      %1283 = vmatpush2.msra.mxu0 0.0
      %1284 = vmatprep.subr.mxu0 0.0
      %1285 = vmatpush2.msra.mxu0 0.0
      %1286 = vmatprep.subr.mxu0 0.0
      %1287 = vmatpush2.msra.mxu0 0.0
      %1288 = vmatprep.subr.mxu0 0.0
      %1289 = vmatpush2.msra.mxu0 0.0
      %1290 = vmatprep.subr.mxu0 0.0
      %1291 = vmatpush2.msra.mxu0 0.0
      %1292 = vmatprep.subr.mxu0 0.0
      %1293 = vmatpush2.msra.mxu0 0.0
      %1294 = vmatprep.subr.mxu0 0.0
      %1295 = vmatpush2.msra.mxu0 0.0
      %1296 = vmatprep.subr.mxu0 0.0
      %1297 = vmatpush2.msra.mxu0 0.0
      %1298 = vmatprep.subr.mxu0 0.0
      %1299 = vmatpush2.msra.mxu0 0.0
      %1300 = vmatprep.subr.mxu0 0.0
      %1301 = vmatpush2.msra.mxu0 0.0
      %1302 = vmatprep.subr.mxu0 0.0
      %1303 = vmatpush2.msra.mxu0 0.0
      %1304 = vmatprep.subr.mxu0 0.0
      %1305 = vmatpush2.msra.mxu0 0.0
      %1306 = vmatprep.subr.mxu0 0.0
      %1307 = vmatpush2.msra.mxu0 0.0
      %1308 = vmatprep.subr.mxu0 0.0
      %1309 = vmatpush2.msra.mxu0 0.0
      %1310 = vmatprep.mubr.f32.mxu0 0.0
      %1311 = vmatmul.mubr.f32.gmra.mxu0 %v1223
      %v1312 = vpop.f32.mrf.mxu0
      %v1313 = vadd.f32 0.0, %v1312
      %v1314 = vpop.f32.mrf.mxu0
      %1315 = vmatprep.mubr.f32.mxu0 0.0
      %1316 = vmatmul.mubr.f32.gmra.mxu0 %v1226
      %v1317 = vpop.f32.mrf.mxu0
      %v1318 = vadd.f32 0.0, %v1317
      %v1319 = vpop.f32.mrf.mxu0
      %1320 = vmatprep.mubr.f32.mxu0 0.0
      %1321 = vmatmul.mubr.f32.gmra.mxu0 %v1229
      %v1322 = vpop.f32.mrf.mxu0
      %v1323 = vadd.f32 0.0, %v1322
      %v1324 = vpop.f32.mrf.mxu0
      %1325 = vmatprep.mubr.f32.mxu0 0.0
      %1326 = vmatmul.mubr.f32.gmra.mxu0 %v1232
      %v1327 = vpop.f32.mrf.mxu0
      %v1328 = vadd.f32 0.0, %v1327
      %v1329 = vpop.f32.mrf.mxu0
      %1330 = vmatprep.mubr.f32.mxu0 0.0
      %1331 = vmatmul.mubr.f32.gmra.mxu0 %v1235
      %v1332 = vpop.f32.mrf.mxu0
      %v1333 = vadd.f32 0.0, %v1332
      %v1334 = vpop.f32.mrf.mxu0
      %1335 = vmatprep.mubr.f32.mxu0 0.0
      %1336 = vmatmul.mubr.f32.gmra.mxu0 %v1238
      %v1337 = vpop.f32.mrf.mxu0
      %v1338 = vadd.f32 0.0, %v1337
      %v1339 = vpop.f32.mrf.mxu0
      %1340 = vmatprep.mubr.f32.mxu0 0.0
      %1341 = vmatmul.mubr.f32.gmra.mxu0 %v1241
      %v1342 = vpop.f32.mrf.mxu0
      %v1343 = vadd.f32 0.0, %v1342
      %v1344 = vpop.f32.mrf.mxu0
      %1345 = vmatprep.mubr.f32.mxu0 0.0
      %1346 = vmatmul.mubr.f32.gmra.mxu0 %v1244
      %v1347 = vpop.f32.mrf.mxu0
      %v1348 = vadd.f32 0.0, %v1347
      %v1349 = vpop.f32.mrf.mxu0
      %1350 = vdwg.mxu0
      %v1351 = vsel %vm701, %v1313, -inf
      %1352 = vmax.xlane.f32.xlu0 %v1351
      %v1353 = vpop.xlane.xlu0 %1352
      %v1354 = vsel %vm701, %v1318, -inf
      %1355 = vmax.xlane.f32.xlu0 %v1354
      %v1356 = vpop.xlane.xlu0 %1355
      %v1357 = vsel %vm701, %v1323, -inf
      %1358 = vmax.xlane.f32.xlu0 %v1357
      %v1359 = vpop.xlane.xlu0 %1358
      %v1360 = vsel %vm701, %v1328, -inf
      %1361 = vmax.xlane.f32.xlu0 %v1360
      %v1362 = vpop.xlane.xlu0 %1361
      %v1363 = vsel %vm701, %v1333, -inf
      %1364 = vmax.xlane.f32.xlu0 %v1363
      %v1365 = vpop.xlane.xlu0 %1364
      %v1366 = vsel %vm701, %v1338, -inf
      %1367 = vmax.xlane.f32.xlu0 %v1366
      %v1368 = vpop.xlane.xlu0 %1367
      %v1369 = vsel %vm701, %v1343, -inf
      %1370 = vmax.xlane.f32.xlu0 %v1369
      %v1371 = vpop.xlane.xlu0 %1370
      %v1372 = vsel %vm701, %v1348, -inf
      %1373 = vmax.xlane.f32.xlu0 %v1372
      %v1374 = vpop.xlane.xlu0 %1373
      %v1375 = vsub.f32 %v1313, %v1353
      %v1376 = vsub.f32 %v1318, %v1356
      %v1377 = vsub.f32 %v1323, %v1359
      %v1378 = vsub.f32 %v1328, %v1362
      %v1379 = vsub.f32 %v1333, %v1365
      %v1380 = vsub.f32 %v1338, %v1368
      %v1381 = vsub.f32 %v1343, %v1371
      %v1382 = vsub.f32 %v1348, %v1374
      %v1383 = vmul.f32 %v1375, 1.442695
      %v1384 = vpow.pop %v1383
      %v1385 = vmul.f32 %v1376, 1.442695
      %v1386 = vpow.pop %v1385
      %v1387 = vmul.f32 %v1377, 1.442695
      %v1388 = vpow.pop %v1387
      %v1389 = vmul.f32 %v1378, 1.442695
      %v1390 = vpow.pop %v1389
      %v1391 = vmul.f32 %v1379, 1.442695
      %v1392 = vpow.pop %v1391
      %v1393 = vmul.f32 %v1380, 1.442695
      %v1394 = vpow.pop %v1393
      %v1395 = vmul.f32 %v1381, 1.442695
      %v1396 = vpow.pop %v1395
      %v1397 = vmul.f32 %v1382, 1.442695
      %v1398 = vpow.pop %v1397
      %v1399 = vsel %vm701, %v1384, 0.0
      %1400 = vadd.xlane.f32.xlu0 %v1399
      %v1401 = vpop.xlane.xlu0 %1400
      %v1402 = vsel %vm701, %v1386, 0.0
      %1403 = vadd.xlane.f32.xlu0 %v1402
      %v1404 = vpop.xlane.xlu0 %1403
      %v1405 = vsel %vm701, %v1388, 0.0
      %1406 = vadd.xlane.f32.xlu0 %v1405
      %v1407 = vpop.xlane.xlu0 %1406
      %v1408 = vsel %vm701, %v1390, 0.0
      %1409 = vadd.xlane.f32.xlu0 %v1408
      %v1410 = vpop.xlane.xlu0 %1409
      %v1411 = vsel %vm701, %v1392, 0.0
      %1412 = vadd.xlane.f32.xlu0 %v1411
      %v1413 = vpop.xlane.xlu0 %1412
      %v1414 = vsel %vm701, %v1394, 0.0
      %1415 = vadd.xlane.f32.xlu0 %v1414
      %v1416 = vpop.xlane.xlu0 %1415
      %v1417 = vsel %vm701, %v1396, 0.0
      %1418 = vadd.xlane.f32.xlu0 %v1417
      %v1419 = vpop.xlane.xlu0 %1418
      %v1420 = vsel %vm701, %v1398, 0.0
      %1421 = vadd.xlane.f32.xlu0 %v1420
      %v1422 = vpop.xlane.xlu0 %1421
      %v1423 = vrcp.pop %v1401
      %v1424 = vrcp.pop %v1404
      %v1425 = vrcp.pop %v1407
      %v1426 = vrcp.pop %v1410
      %v1427 = vrcp.pop %v1413
      %v1428 = vrcp.pop %v1416
      %v1429 = vrcp.pop %v1419
      %v1430 = vrcp.pop %v1422
      %v1431 = vmul.f32 %v1384, %v1423
      %v1432 = vmul.f32 %v1386, %v1424
      %v1433 = vmul.f32 %v1388, %v1425
      %v1434 = vmul.f32 %v1390, %v1426
      %v1435 = vmul.f32 %v1392, %v1427
      %v1436 = vmul.f32 %v1394, %v1428
      %v1437 = vmul.f32 %v1396, %v1429
      %v1438 = vmul.f32 %v1398, %v1430
      %s1439 = scalar_lea.vmem %s276, 64
      %v1440 = vld [vmem:[%s1439] sm:$0xff]
      %v1441 = vld [vmem:[%s1439 + $0x8] sm:$0xff]
      %v1442 = vld [vmem:[%s1439 + $0x10] sm:$0xff]
      %v1443 = vld [vmem:[%s1439 + $0x18] sm:$0xff]
      %v1444 = vld [vmem:[%s1439 + $0x20] sm:$0xff]
      %v1445 = vld [vmem:[%s1439 + $0x28] sm:$0xff]
      %v1446 = vld [vmem:[%s1439 + $0x30] sm:$0xff]
      %v1447 = vld [vmem:[%s1439 + $0x38] sm:$0xff]
      %v1449 = vsel %vm701, %v1431, 0
      %v1452 = vsel %vm701, %v1432, 0
      %v1455 = vsel %vm701, %v1433, 0
      %v1458 = vsel %vm701, %v1434, 0
      %v1461 = vsel %vm701, %v1435, 0
      %v1464 = vsel %vm701, %v1436, 0
      %v1467 = vsel %vm701, %v1437, 0
      %v1470 = vsel %vm701, %v1438, 0
      %1472 = vmatprep.subr.mxu0 0.0
      %1473 = vmatpush1.msra.mxu0 0.0
      %1474 = vmatprep.subr.mxu0 0.0
      %1475 = vmatpush1.msra.mxu0 0.0
      %1476 = vmatprep.subr.mxu0 0.0
      %1477 = vmatpush1.msra.mxu0 0.0
      %1478 = vmatprep.subr.mxu0 0.0
      %1479 = vmatpush1.msra.mxu0 0.0
      %1480 = vmatprep.subr.mxu0 0.0
      %1481 = vmatpush1.msra.mxu0 0.0
      %1482 = vmatprep.subr.mxu0 0.0
      %1483 = vmatpush1.msra.mxu0 0.0
      %1484 = vmatprep.subr.mxu0 0.0
      %1485 = vmatpush1.msra.mxu0 0.0
      %1486 = vmatprep.subr.mxu0 0.0
      %1487 = vmatpush1.msra.mxu0 0.0
      %1488 = vmatprep.subr.mxu0 0.0
      %1489 = vmatpush1.msra.mxu0 %v1105
      %1490 = vmatprep.subr.mxu0 0.0
      %1491 = vmatpush1.msra.mxu0 %v1100
      %1492 = vmatprep.subr.mxu0 0.0
      %1493 = vmatpush1.msra.mxu0 %v1095
      %1494 = vmatprep.subr.mxu0 0.0
      %1495 = vmatpush1.msra.mxu0 %v1090
      %1496 = vmatprep.subr.mxu0 0.0
      %1497 = vmatpush1.msra.mxu0 %v1085
      %1498 = vmatprep.subr.mxu0 0.0
      %1499 = vmatpush1.msra.mxu0 %v1080
      %1500 = vmatprep.subr.mxu0 0.0
      %1501 = vmatpush1.msra.mxu0 %v1075
      %1502 = vmatprep.subr.mxu0 0.0
      %1503 = vmatpush1.msra.mxu0 %v1070
      %1504 = vmatprep.subr.mxu0 0.0
      %1505 = vmatpush2.msra.mxu0 0.0
      %1506 = vmatprep.subr.mxu0 0.0
      %1507 = vmatpush2.msra.mxu0 0.0
      %1508 = vmatprep.subr.mxu0 0.0
      %1509 = vmatpush2.msra.mxu0 0.0
      %1510 = vmatprep.subr.mxu0 0.0
      %1511 = vmatpush2.msra.mxu0 0.0
      %1512 = vmatprep.subr.mxu0 0.0
      %1513 = vmatpush2.msra.mxu0 0.0
      %1514 = vmatprep.subr.mxu0 0.0
      %1515 = vmatpush2.msra.mxu0 0.0
      %1516 = vmatprep.subr.mxu0 0.0
      %1517 = vmatpush2.msra.mxu0 0.0
      %1518 = vmatprep.subr.mxu0 0.0
      %1519 = vmatpush2.msra.mxu0 0.0
      %1520 = vmatprep.subr.mxu0 0.0
      %1521 = vmatpush2.msra.mxu0 0.0
      %1522 = vmatprep.subr.mxu0 0.0
      %1523 = vmatpush2.msra.mxu0 0.0
      %1524 = vmatprep.subr.mxu0 0.0
      %1525 = vmatpush2.msra.mxu0 0.0
      %1526 = vmatprep.subr.mxu0 0.0
      %1527 = vmatpush2.msra.mxu0 0.0
      %1528 = vmatprep.subr.mxu0 0.0
      %1529 = vmatpush2.msra.mxu0 0.0
      %1530 = vmatprep.subr.mxu0 0.0
      %1531 = vmatpush2.msra.mxu0 0.0
      %1532 = vmatprep.subr.mxu0 0.0
      %1533 = vmatpush2.msra.mxu0 0.0
      %1534 = vmatprep.subr.mxu0 0.0
      %1535 = vmatpush2.msra.mxu0 0.0
      %1536 = vmatprep.mubr.f32.mxu0 0.0
      %1537 = vmatmul.mubr.f32.gmra.mxu0 %v1449
      %v1538 = vpop.f32.mrf.mxu0
      %v1539 = vadd.f32 %v1440, %v1538
      %v1540 = vpop.f32.mrf.mxu0
      %1541 = vmatprep.mubr.f32.mxu0 0.0
      %1542 = vmatmul.mubr.f32.gmra.mxu0 %v1452
      %v1543 = vpop.f32.mrf.mxu0
      %v1544 = vadd.f32 %v1441, %v1543
      %v1545 = vpop.f32.mrf.mxu0
      %1546 = vmatprep.mubr.f32.mxu0 0.0
      %1547 = vmatmul.mubr.f32.gmra.mxu0 %v1455
      %v1548 = vpop.f32.mrf.mxu0
      %v1549 = vadd.f32 %v1442, %v1548
      %v1550 = vpop.f32.mrf.mxu0
      %1551 = vmatprep.mubr.f32.mxu0 0.0
      %1552 = vmatmul.mubr.f32.gmra.mxu0 %v1458
      %v1553 = vpop.f32.mrf.mxu0
      %v1554 = vadd.f32 %v1443, %v1553
      %v1555 = vpop.f32.mrf.mxu0
      %1556 = vmatprep.mubr.f32.mxu0 0.0
      %1557 = vmatmul.mubr.f32.gmra.mxu0 %v1461
      %v1558 = vpop.f32.mrf.mxu0
      %v1559 = vadd.f32 %v1444, %v1558
      %v1560 = vpop.f32.mrf.mxu0
      %1561 = vmatprep.mubr.f32.mxu0 0.0
      %1562 = vmatmul.mubr.f32.gmra.mxu0 %v1464
      %v1563 = vpop.f32.mrf.mxu0
      %v1564 = vadd.f32 %v1445, %v1563
      %v1565 = vpop.f32.mrf.mxu0
      %1566 = vmatprep.mubr.f32.mxu0 0.0
      %1567 = vmatmul.mubr.f32.gmra.mxu0 %v1467
      %v1568 = vpop.f32.mrf.mxu0
      %v1569 = vadd.f32 %v1446, %v1568
      %v1570 = vpop.f32.mrf.mxu0
      %1571 = vmatprep.mubr.f32.mxu0 0.0
      %1572 = vmatmul.mubr.f32.gmra.mxu0 %v1470
      %v1573 = vpop.f32.mrf.mxu0
      %v1574 = vadd.f32 %v1447, %v1573
      %v1575 = vpop.f32.mrf.mxu0
      %1576 = vdwg.mxu0
      %s1577 = scalar_lea.vmem %s283, 64
      %1578 = vst.msk [vmem:[%s1577] sm:$0xff] %vm328, %v1539
      %1579 = vst.msk [vmem:[%s1577 + $0x8] sm:$0xff] %vm328, %v1544
      %1580 = vst.msk [vmem:[%s1577 + $0x10] sm:$0xff] %vm328, %v1549
      %1581 = vst.msk [vmem:[%s1577 + $0x18] sm:$0xff] %vm328, %v1554
      %1582 = vst.msk [vmem:[%s1577 + $0x20] sm:$0xff] %vm328, %v1559
      %1583 = vst.msk [vmem:[%s1577 + $0x28] sm:$0xff] %vm328, %v1564
      %1584 = vst.msk [vmem:[%s1577 + $0x30] sm:$0xff] %vm328, %v1569
      %1585 = vst.msk [vmem:[%s1577 + $0x38] sm:$0xff] %vm328, %v1574
      %s1586 = scalar_lea.vmem %s269, 32
      %v1587 = vld [vmem:[%s1586] sm:$0xff]
      %v1588 = vld [vmem:[%s1586 + $0x8] sm:$0xff]
      %1589 = vxpose.xlu0.b32.start [1/16] %v1587, 128
      %1590 = vxpose.xlu0.b32.cont [2/16] %v1588, 128
      %1591 = vxpose.xlu0.b32.cont [3/16] 0.0, 128
      %1592 = vxpose.xlu0.b32.cont [4/16] 0.0, 128
      %1593 = vxpose.xlu0.b32.cont [5/16] 0.0, 128
      %1594 = vxpose.xlu0.b32.cont [6/16] 0.0, 128
      %1595 = vxpose.xlu0.b32.cont [7/16] 0.0, 128
      %1596 = vxpose.xlu0.b32.cont [8/16] 0.0, 128
      %1597 = vxpose.xlu0.b32.cont [9/16] 0.0, 128
      %1598 = vxpose.xlu0.b32.cont [10/16] 0.0, 128
      %1599 = vxpose.xlu0.b32.cont [11/16] 0.0, 128
      %1600 = vxpose.xlu0.b32.cont [12/16] 0.0, 128
      %1601 = vxpose.xlu0.b32.cont [13/16] 0.0, 128
      %1602 = vxpose.xlu0.b32.cont [14/16] 0.0, 128
      %1603 = vxpose.xlu0.b32.cont [15/16] 0.0, 128
      %1604 = vxpose.xlu0.b32.end [16/16] 0.0, 128
      %v1605 = vpop.trf.xlu0
      %v1606 = vpop.trf.xlu0
      %v1607 = vpop.trf.xlu0
      %v1608 = vpop.trf.xlu0
      %v1609 = vpop.trf.xlu0
      %v1610 = vpop.trf.xlu0
      %v1611 = vpop.trf.xlu0
      %v1612 = vpop.trf.xlu0
      %v1613 = vpop.trf.xlu0
      %v1614 = vpop.trf.xlu0
      %v1615 = vpop.trf.xlu0
      %v1616 = vpop.trf.xlu0
      %v1617 = vpop.trf.xlu0
      %v1618 = vpop.trf.xlu0
      %v1619 = vpop.trf.xlu0
      %v1620 = vpop.trf.xlu0
      %v1621 = vld [vmem:[%s2] sm:$0xff]
      %v1622 = vld [vmem:[%s2 + $0x8] sm:$0xff]
      %v1623 = vld [vmem:[%s3] sm:$0x1]
      %v1625 = vlaneseq
      %v1626 = vshrl.u32 %v1625, 7
      %v1627 = vsub.s32 0, %v1626
      %v1628 = vrot.slane %v1623, %v1627
      %v1631 = vsel %vm328, %v1605, 0
      %v1634 = vsel %vm328, %v1606, 0
      %v1637 = vsel %vm328, %v1607, 0
      %v1640 = vsel %vm328, %v1608, 0
      %v1643 = vsel %vm328, %v1609, 0
      %v1646 = vsel %vm328, %v1610, 0
      %v1649 = vsel %vm328, %v1611, 0
      %v1652 = vsel %vm328, %v1612, 0
      %1654 = vmatprep.subr.mxu0 0.0
      %1655 = vmatpush1.msra.mxu0 0.0
      %1656 = vmatprep.subr.mxu0 0.0
      %1657 = vmatpush1.msra.mxu0 0.0
      %1658 = vmatprep.subr.mxu0 0.0
      %1659 = vmatpush1.msra.mxu0 0.0
      %1660 = vmatprep.subr.mxu0 0.0
      %1661 = vmatpush1.msra.mxu0 0.0
      %1662 = vmatprep.subr.mxu0 0.0
      %1663 = vmatpush1.msra.mxu0 0.0
      %1664 = vmatprep.subr.mxu0 0.0
      %1665 = vmatpush1.msra.mxu0 0.0
      %1666 = vmatprep.subr.mxu0 0.0
      %1667 = vmatpush1.msra.mxu0 0.0
      %1668 = vmatprep.subr.mxu0 0.0
      %1669 = vmatpush1.msra.mxu0 0.0
      %1670 = vmatprep.subr.mxu0 0.0
      %1671 = vmatpush1.msra.mxu0 0.0
      %1672 = vmatprep.subr.mxu0 0.0
      %1673 = vmatpush1.msra.mxu0 0.0
      %1674 = vmatprep.subr.mxu0 0.0
      %1675 = vmatpush1.msra.mxu0 0.0
      %1676 = vmatprep.subr.mxu0 0.0
      %1677 = vmatpush1.msra.mxu0 0.0
      %1678 = vmatprep.subr.mxu0 0.0
      %1679 = vmatpush1.msra.mxu0 0.0
      %1680 = vmatprep.subr.mxu0 0.0
      %1681 = vmatpush1.msra.mxu0 0.0
      %1682 = vmatprep.subr.mxu0 0.0
      %1683 = vmatpush1.msra.mxu0 %v1622
      %1684 = vmatprep.subr.mxu0 0.0
      %1685 = vmatpush1.msra.mxu0 %v1621
      %1686 = vmatprep.subr.mxu0 0.0
      %1687 = vmatpush2.msra.mxu0 0.0
      %1688 = vmatprep.subr.mxu0 0.0
      %1689 = vmatpush2.msra.mxu0 0.0
      %1690 = vmatprep.subr.mxu0 0.0
      %1691 = vmatpush2.msra.mxu0 0.0
      %1692 = vmatprep.subr.mxu0 0.0
      %1693 = vmatpush2.msra.mxu0 0.0
      %1694 = vmatprep.subr.mxu0 0.0
      %1695 = vmatpush2.msra.mxu0 0.0
      %1696 = vmatprep.subr.mxu0 0.0
      %1697 = vmatpush2.msra.mxu0 0.0
      %1698 = vmatprep.subr.mxu0 0.0
      %1699 = vmatpush2.msra.mxu0 0.0
      %1700 = vmatprep.subr.mxu0 0.0
      %1701 = vmatpush2.msra.mxu0 0.0
      %1702 = vmatprep.subr.mxu0 0.0
      %1703 = vmatpush2.msra.mxu0 0.0
      %1704 = vmatprep.subr.mxu0 0.0
      %1705 = vmatpush2.msra.mxu0 0.0
      %1706 = vmatprep.subr.mxu0 0.0
      %1707 = vmatpush2.msra.mxu0 0.0
      %1708 = vmatprep.subr.mxu0 0.0
      %1709 = vmatpush2.msra.mxu0 0.0
      %1710 = vmatprep.subr.mxu0 0.0
      %1711 = vmatpush2.msra.mxu0 0.0
      %1712 = vmatprep.subr.mxu0 0.0
      %1713 = vmatpush2.msra.mxu0 0.0
      %1714 = vmatprep.subr.mxu0 0.0
      %1715 = vmatpush2.msra.mxu0 0.0
      %1716 = vmatprep.subr.mxu0 0.0
      %1717 = vmatpush2.msra.mxu0 0.0
      %1718 = vmatprep.mubr.f32.mxu0 0.0
      %1719 = vmatmul.mubr.f32.gmra.mxu0 %v1631
      %v1720 = vpop.f32.mrf.mxu0
      %v1721 = vadd.f32 %v1628, %v1720
      %v1722 = vpop.f32.mrf.mxu0
      %1723 = vmatprep.mubr.f32.mxu0 0.0
      %1724 = vmatmul.mubr.f32.gmra.mxu0 %v1634
      %v1725 = vpop.f32.mrf.mxu0
      %v1726 = vadd.f32 %v1628, %v1725
      %v1727 = vpop.f32.mrf.mxu0
      %1728 = vmatprep.mubr.f32.mxu0 0.0
      %1729 = vmatmul.mubr.f32.gmra.mxu0 %v1637
      %v1730 = vpop.f32.mrf.mxu0
      %v1731 = vadd.f32 %v1628, %v1730
      %v1732 = vpop.f32.mrf.mxu0
      %1733 = vmatprep.mubr.f32.mxu0 0.0
      %1734 = vmatmul.mubr.f32.gmra.mxu0 %v1640
      %v1735 = vpop.f32.mrf.mxu0
      %v1736 = vadd.f32 %v1628, %v1735
      %v1737 = vpop.f32.mrf.mxu0
      %1738 = vmatprep.mubr.f32.mxu0 0.0
      %1739 = vmatmul.mubr.f32.gmra.mxu0 %v1643
      %v1740 = vpop.f32.mrf.mxu0
      %v1741 = vadd.f32 %v1628, %v1740
      %v1742 = vpop.f32.mrf.mxu0
      %1743 = vmatprep.mubr.f32.mxu0 0.0
      %1744 = vmatmul.mubr.f32.gmra.mxu0 %v1646
      %v1745 = vpop.f32.mrf.mxu0
      %v1746 = vadd.f32 %v1628, %v1745
      %v1747 = vpop.f32.mrf.mxu0
      %1748 = vmatprep.mubr.f32.mxu0 0.0
      %1749 = vmatmul.mubr.f32.gmra.mxu0 %v1649
      %v1750 = vpop.f32.mrf.mxu0
      %v1751 = vadd.f32 %v1628, %v1750
      %v1752 = vpop.f32.mrf.mxu0
      %1753 = vmatprep.mubr.f32.mxu0 0.0
      %1754 = vmatmul.mubr.f32.gmra.mxu0 %v1652
      %v1755 = vpop.f32.mrf.mxu0
      %v1756 = vadd.f32 %v1628, %v1755
      %v1757 = vpop.f32.mrf.mxu0
      %1758 = vdwg.mxu0
      %v1759 = vld [vmem:[%s4] sm:$0xff]
      %v1760 = vld [vmem:[%s4 + $0x8] sm:$0xff]
      %v1761 = vld [vmem:[%s5] sm:$0x1]
      %v1763 = vlaneseq
      %v1764 = vshrl.u32 %v1763, 7
      %v1765 = vsub.s32 0, %v1764
      %v1766 = vrot.slane %v1761, %v1765
      %1768 = vmatprep.subr.mxu0 0.0
      %1769 = vmatpush1.msra.mxu0 0.0
      %1770 = vmatprep.subr.mxu0 0.0
      %1771 = vmatpush1.msra.mxu0 0.0
      %1772 = vmatprep.subr.mxu0 0.0
      %1773 = vmatpush1.msra.mxu0 0.0
      %1774 = vmatprep.subr.mxu0 0.0
      %1775 = vmatpush1.msra.mxu0 0.0
      %1776 = vmatprep.subr.mxu0 0.0
      %1777 = vmatpush1.msra.mxu0 0.0
      %1778 = vmatprep.subr.mxu0 0.0
      %1779 = vmatpush1.msra.mxu0 0.0
      %1780 = vmatprep.subr.mxu0 0.0
      %1781 = vmatpush1.msra.mxu0 0.0
      %1782 = vmatprep.subr.mxu0 0.0
      %1783 = vmatpush1.msra.mxu0 0.0
      %1784 = vmatprep.subr.mxu0 0.0
      %1785 = vmatpush1.msra.mxu0 0.0
      %1786 = vmatprep.subr.mxu0 0.0
      %1787 = vmatpush1.msra.mxu0 0.0
      %1788 = vmatprep.subr.mxu0 0.0
      %1789 = vmatpush1.msra.mxu0 0.0
      %1790 = vmatprep.subr.mxu0 0.0
      %1791 = vmatpush1.msra.mxu0 0.0
      %1792 = vmatprep.subr.mxu0 0.0
      %1793 = vmatpush1.msra.mxu0 0.0
      %1794 = vmatprep.subr.mxu0 0.0
      %1795 = vmatpush1.msra.mxu0 0.0
      %1796 = vmatprep.subr.mxu0 0.0
      %1797 = vmatpush1.msra.mxu0 %v1760
      %1798 = vmatprep.subr.mxu0 0.0
      %1799 = vmatpush1.msra.mxu0 %v1759
      %1800 = vmatprep.subr.mxu0 0.0
      %1801 = vmatpush2.msra.mxu0 0.0
      %1802 = vmatprep.subr.mxu0 0.0
      %1803 = vmatpush2.msra.mxu0 0.0
      %1804 = vmatprep.subr.mxu0 0.0
      %1805 = vmatpush2.msra.mxu0 0.0
      %1806 = vmatprep.subr.mxu0 0.0
      %1807 = vmatpush2.msra.mxu0 0.0
      %1808 = vmatprep.subr.mxu0 0.0
      %1809 = vmatpush2.msra.mxu0 0.0
      %1810 = vmatprep.subr.mxu0 0.0
      %1811 = vmatpush2.msra.mxu0 0.0
      %1812 = vmatprep.subr.mxu0 0.0
      %1813 = vmatpush2.msra.mxu0 0.0
      %1814 = vmatprep.subr.mxu0 0.0
      %1815 = vmatpush2.msra.mxu0 0.0
      %1816 = vmatprep.subr.mxu0 0.0
      %1817 = vmatpush2.msra.mxu0 0.0
      %1818 = vmatprep.subr.mxu0 0.0
      %1819 = vmatpush2.msra.mxu0 0.0
      %1820 = vmatprep.subr.mxu0 0.0
      %1821 = vmatpush2.msra.mxu0 0.0
      %1822 = vmatprep.subr.mxu0 0.0
      %1823 = vmatpush2.msra.mxu0 0.0
      %1824 = vmatprep.subr.mxu0 0.0
      %1825 = vmatpush2.msra.mxu0 0.0
      %1826 = vmatprep.subr.mxu0 0.0
      %1827 = vmatpush2.msra.mxu0 0.0
      %1828 = vmatprep.subr.mxu0 0.0
      %1829 = vmatpush2.msra.mxu0 0.0
      %1830 = vmatprep.subr.mxu0 0.0
      %1831 = vmatpush2.msra.mxu0 0.0
      %1832 = vmatprep.mubr.f32.mxu0 0.0
      %1833 = vmatmul.mubr.f32.gmra.mxu0 %v1631
      %v1834 = vpop.f32.mrf.mxu0
      %v1835 = vadd.f32 %v1766, %v1834
      %v1836 = vpop.f32.mrf.mxu0
      %1837 = vmatprep.mubr.f32.mxu0 0.0
      %1838 = vmatmul.mubr.f32.gmra.mxu0 %v1634
      %v1839 = vpop.f32.mrf.mxu0
      %v1840 = vadd.f32 %v1766, %v1839
      %v1841 = vpop.f32.mrf.mxu0
      %1842 = vmatprep.mubr.f32.mxu0 0.0
      %1843 = vmatmul.mubr.f32.gmra.mxu0 %v1637
      %v1844 = vpop.f32.mrf.mxu0
      %v1845 = vadd.f32 %v1766, %v1844
      %v1846 = vpop.f32.mrf.mxu0
      %1847 = vmatprep.mubr.f32.mxu0 0.0
      %1848 = vmatmul.mubr.f32.gmra.mxu0 %v1640
      %v1849 = vpop.f32.mrf.mxu0
      %v1850 = vadd.f32 %v1766, %v1849
      %v1851 = vpop.f32.mrf.mxu0
      %1852 = vmatprep.mubr.f32.mxu0 0.0
      %1853 = vmatmul.mubr.f32.gmra.mxu0 %v1643
      %v1854 = vpop.f32.mrf.mxu0
      %v1855 = vadd.f32 %v1766, %v1854
      %v1856 = vpop.f32.mrf.mxu0
      %1857 = vmatprep.mubr.f32.mxu0 0.0
      %1858 = vmatmul.mubr.f32.gmra.mxu0 %v1646
      %v1859 = vpop.f32.mrf.mxu0
      %v1860 = vadd.f32 %v1766, %v1859
      %v1861 = vpop.f32.mrf.mxu0
      %1862 = vmatprep.mubr.f32.mxu0 0.0
      %1863 = vmatmul.mubr.f32.gmra.mxu0 %v1649
      %v1864 = vpop.f32.mrf.mxu0
      %v1865 = vadd.f32 %v1766, %v1864
      %v1866 = vpop.f32.mrf.mxu0
      %1867 = vmatprep.mubr.f32.mxu0 0.0
      %1868 = vmatmul.mubr.f32.gmra.mxu0 %v1652
      %v1869 = vpop.f32.mrf.mxu0
      %v1870 = vadd.f32 %v1766, %v1869
      %v1871 = vpop.f32.mrf.mxu0
      %1872 = vdwg.mxu0
      %v1874 = vsel %vm328, %v1835, 0
      %v1877 = vsel %vm328, %v1840, 0
      %v1880 = vsel %vm328, %v1845, 0
      %v1883 = vsel %vm328, %v1850, 0
      %v1886 = vsel %vm328, %v1855, 0
      %v1889 = vsel %vm328, %v1860, 0
      %v1892 = vsel %vm328, %v1865, 0
      %v1895 = vsel %vm328, %v1870, 0
      %1897 = vmatprep.subr.mxu0 0.0
      %1898 = vmatpush1.msra.mxu0 0.0
      %1899 = vmatprep.subr.mxu0 0.0
      %1900 = vmatpush1.msra.mxu0 0.0
      %1901 = vmatprep.subr.mxu0 0.0
      %1902 = vmatpush1.msra.mxu0 0.0
      %1903 = vmatprep.subr.mxu0 0.0
      %1904 = vmatpush1.msra.mxu0 0.0
      %1905 = vmatprep.subr.mxu0 0.0
      %1906 = vmatpush1.msra.mxu0 0.0
      %1907 = vmatprep.subr.mxu0 0.0
      %1908 = vmatpush1.msra.mxu0 0.0
      %1909 = vmatprep.subr.mxu0 0.0
      %1910 = vmatpush1.msra.mxu0 0.0
      %1911 = vmatprep.subr.mxu0 0.0
      %1912 = vmatpush1.msra.mxu0 0.0
      %1913 = vmatprep.subr.mxu0 0.0
      %1914 = vmatpush1.msra.mxu0 0.0
      %1915 = vmatprep.subr.mxu0 0.0
      %1916 = vmatpush1.msra.mxu0 0.0
      %1917 = vmatprep.subr.mxu0 0.0
      %1918 = vmatpush1.msra.mxu0 0.0
      %1919 = vmatprep.subr.mxu0 0.0
      %1920 = vmatpush1.msra.mxu0 0.0
      %1921 = vmatprep.subr.mxu0 0.0
      %1922 = vmatpush1.msra.mxu0 0.0
      %1923 = vmatprep.subr.mxu0 0.0
      %1924 = vmatpush1.msra.mxu0 0.0
      %1925 = vmatprep.subr.mxu0 0.0
      %1926 = vmatpush1.msra.mxu0 %v1588
      %1927 = vmatprep.subr.mxu0 0.0
      %1928 = vmatpush1.msra.mxu0 %v1587
      %1929 = vmatprep.subr.mxu0 0.0
      %1930 = vmatpush2.msra.mxu0 0.0
      %1931 = vmatprep.subr.mxu0 0.0
      %1932 = vmatpush2.msra.mxu0 0.0
      %1933 = vmatprep.subr.mxu0 0.0
      %1934 = vmatpush2.msra.mxu0 0.0
      %1935 = vmatprep.subr.mxu0 0.0
      %1936 = vmatpush2.msra.mxu0 0.0
      %1937 = vmatprep.subr.mxu0 0.0
      %1938 = vmatpush2.msra.mxu0 0.0
      %1939 = vmatprep.subr.mxu0 0.0
      %1940 = vmatpush2.msra.mxu0 0.0
      %1941 = vmatprep.subr.mxu0 0.0
      %1942 = vmatpush2.msra.mxu0 0.0
      %1943 = vmatprep.subr.mxu0 0.0
      %1944 = vmatpush2.msra.mxu0 0.0
      %1945 = vmatprep.subr.mxu0 0.0
      %1946 = vmatpush2.msra.mxu0 0.0
      %1947 = vmatprep.subr.mxu0 0.0
      %1948 = vmatpush2.msra.mxu0 0.0
      %1949 = vmatprep.subr.mxu0 0.0
      %1950 = vmatpush2.msra.mxu0 0.0
      %1951 = vmatprep.subr.mxu0 0.0
      %1952 = vmatpush2.msra.mxu0 0.0
      %1953 = vmatprep.subr.mxu0 0.0
      %1954 = vmatpush2.msra.mxu0 0.0
      %1955 = vmatprep.subr.mxu0 0.0
      %1956 = vmatpush2.msra.mxu0 0.0
      %1957 = vmatprep.subr.mxu0 0.0
      %1958 = vmatpush2.msra.mxu0 0.0
      %1959 = vmatprep.subr.mxu0 0.0
      %1960 = vmatpush2.msra.mxu0 0.0
      %1961 = vmatprep.mubr.f32.mxu0 0.0
      %1962 = vmatmul.mubr.f32.gmra.mxu0 %v1874
      %v1963 = vpop.f32.mrf.mxu0
      %v1964 = vadd.f32 0.0, %v1963
      %v1965 = vpop.f32.mrf.mxu0
      %1966 = vmatprep.mubr.f32.mxu0 0.0
      %1967 = vmatmul.mubr.f32.gmra.mxu0 %v1877
      %v1968 = vpop.f32.mrf.mxu0
      %v1969 = vadd.f32 0.0, %v1968
      %v1970 = vpop.f32.mrf.mxu0
      %1971 = vmatprep.mubr.f32.mxu0 0.0
      %1972 = vmatmul.mubr.f32.gmra.mxu0 %v1880
      %v1973 = vpop.f32.mrf.mxu0
      %v1974 = vadd.f32 0.0, %v1973
      %v1975 = vpop.f32.mrf.mxu0
      %1976 = vmatprep.mubr.f32.mxu0 0.0
      %1977 = vmatmul.mubr.f32.gmra.mxu0 %v1883
      %v1978 = vpop.f32.mrf.mxu0
      %v1979 = vadd.f32 0.0, %v1978
      %v1980 = vpop.f32.mrf.mxu0
      %1981 = vmatprep.mubr.f32.mxu0 0.0
      %1982 = vmatmul.mubr.f32.gmra.mxu0 %v1886
      %v1983 = vpop.f32.mrf.mxu0
      %v1984 = vadd.f32 0.0, %v1983
      %v1985 = vpop.f32.mrf.mxu0
      %1986 = vmatprep.mubr.f32.mxu0 0.0
      %1987 = vmatmul.mubr.f32.gmra.mxu0 %v1889
      %v1988 = vpop.f32.mrf.mxu0
      %v1989 = vadd.f32 0.0, %v1988
      %v1990 = vpop.f32.mrf.mxu0
      %1991 = vmatprep.mubr.f32.mxu0 0.0
      %1992 = vmatmul.mubr.f32.gmra.mxu0 %v1892
      %v1993 = vpop.f32.mrf.mxu0
      %v1994 = vadd.f32 0.0, %v1993
      %v1995 = vpop.f32.mrf.mxu0
      %1996 = vmatprep.mubr.f32.mxu0 0.0
      %1997 = vmatmul.mubr.f32.gmra.mxu0 %v1895
      %v1998 = vpop.f32.mrf.mxu0
      %v1999 = vadd.f32 0.0, %v1998
      %v2000 = vpop.f32.mrf.mxu0
      %2001 = vdwg.mxu0
      %v2002 = vsel %vm701, %v1964, -inf
      %2003 = vmax.xlane.f32.xlu0 %v2002
      %v2004 = vpop.xlane.xlu0 %2003
      %v2005 = vsel %vm701, %v1969, -inf
      %2006 = vmax.xlane.f32.xlu0 %v2005
      %v2007 = vpop.xlane.xlu0 %2006
      %v2008 = vsel %vm701, %v1974, -inf
      %2009 = vmax.xlane.f32.xlu0 %v2008
      %v2010 = vpop.xlane.xlu0 %2009
      %v2011 = vsel %vm701, %v1979, -inf
      %2012 = vmax.xlane.f32.xlu0 %v2011
      %v2013 = vpop.xlane.xlu0 %2012
      %v2014 = vsel %vm701, %v1984, -inf
      %2015 = vmax.xlane.f32.xlu0 %v2014
      %v2016 = vpop.xlane.xlu0 %2015
      %v2017 = vsel %vm701, %v1989, -inf
      %2018 = vmax.xlane.f32.xlu0 %v2017
      %v2019 = vpop.xlane.xlu0 %2018
      %v2020 = vsel %vm701, %v1994, -inf
      %2021 = vmax.xlane.f32.xlu0 %v2020
      %v2022 = vpop.xlane.xlu0 %2021
      %v2023 = vsel %vm701, %v1999, -inf
      %2024 = vmax.xlane.f32.xlu0 %v2023
      %v2025 = vpop.xlane.xlu0 %2024
      %v2026 = vsub.f32 %v1964, %v2004
      %v2027 = vsub.f32 %v1969, %v2007
      %v2028 = vsub.f32 %v1974, %v2010
      %v2029 = vsub.f32 %v1979, %v2013
      %v2030 = vsub.f32 %v1984, %v2016
      %v2031 = vsub.f32 %v1989, %v2019
      %v2032 = vsub.f32 %v1994, %v2022
      %v2033 = vsub.f32 %v1999, %v2025
      %v2034 = vmul.f32 %v2026, 1.442695
      %v2035 = vpow.pop %v2034
      %v2036 = vmul.f32 %v2027, 1.442695
      %v2037 = vpow.pop %v2036
      %v2038 = vmul.f32 %v2028, 1.442695
      %v2039 = vpow.pop %v2038
      %v2040 = vmul.f32 %v2029, 1.442695
      %v2041 = vpow.pop %v2040
      %v2042 = vmul.f32 %v2030, 1.442695
      %v2043 = vpow.pop %v2042
      %v2044 = vmul.f32 %v2031, 1.442695
      %v2045 = vpow.pop %v2044
      %v2046 = vmul.f32 %v2032, 1.442695
      %v2047 = vpow.pop %v2046
      %v2048 = vmul.f32 %v2033, 1.442695
      %v2049 = vpow.pop %v2048
      %v2050 = vsel %vm701, %v2035, 0.0
      %2051 = vadd.xlane.f32.xlu0 %v2050
      %v2052 = vpop.xlane.xlu0 %2051
      %v2053 = vsel %vm701, %v2037, 0.0
      %2054 = vadd.xlane.f32.xlu0 %v2053
      %v2055 = vpop.xlane.xlu0 %2054
      %v2056 = vsel %vm701, %v2039, 0.0
      %2057 = vadd.xlane.f32.xlu0 %v2056
      %v2058 = vpop.xlane.xlu0 %2057
      %v2059 = vsel %vm701, %v2041, 0.0
      %2060 = vadd.xlane.f32.xlu0 %v2059
      %v2061 = vpop.xlane.xlu0 %2060
      %v2062 = vsel %vm701, %v2043, 0.0
      %2063 = vadd.xlane.f32.xlu0 %v2062
      %v2064 = vpop.xlane.xlu0 %2063
      %v2065 = vsel %vm701, %v2045, 0.0
      %2066 = vadd.xlane.f32.xlu0 %v2065
      %v2067 = vpop.xlane.xlu0 %2066
      %v2068 = vsel %vm701, %v2047, 0.0
      %2069 = vadd.xlane.f32.xlu0 %v2068
      %v2070 = vpop.xlane.xlu0 %2069
      %v2071 = vsel %vm701, %v2049, 0.0
      %2072 = vadd.xlane.f32.xlu0 %v2071
      %v2073 = vpop.xlane.xlu0 %2072
      %v2074 = vrcp.pop %v2052
      %v2075 = vrcp.pop %v2055
      %v2076 = vrcp.pop %v2058
      %v2077 = vrcp.pop %v2061
      %v2078 = vrcp.pop %v2064
      %v2079 = vrcp.pop %v2067
      %v2080 = vrcp.pop %v2070
      %v2081 = vrcp.pop %v2073
      %v2082 = vmul.f32 %v2035, %v2074
      %v2083 = vmul.f32 %v2037, %v2075
      %v2084 = vmul.f32 %v2039, %v2076
      %v2085 = vmul.f32 %v2041, %v2077
      %v2086 = vmul.f32 %v2043, %v2078
      %v2087 = vmul.f32 %v2045, %v2079
      %v2088 = vmul.f32 %v2047, %v2080
      %v2089 = vmul.f32 %v2049, %v2081
      %s2090 = scalar_lea.vmem %s276, 128
      %v2091 = vld [vmem:[%s2090] sm:$0xff]
      %v2092 = vld [vmem:[%s2090 + $0x8] sm:$0xff]
      %v2093 = vld [vmem:[%s2090 + $0x10] sm:$0xff]
      %v2094 = vld [vmem:[%s2090 + $0x18] sm:$0xff]
      %v2095 = vld [vmem:[%s2090 + $0x20] sm:$0xff]
      %v2096 = vld [vmem:[%s2090 + $0x28] sm:$0xff]
      %v2097 = vld [vmem:[%s2090 + $0x30] sm:$0xff]
      %v2098 = vld [vmem:[%s2090 + $0x38] sm:$0xff]
      %v2100 = vsel %vm701, %v2082, 0
      %v2103 = vsel %vm701, %v2083, 0
      %v2106 = vsel %vm701, %v2084, 0
      %v2109 = vsel %vm701, %v2085, 0
      %v2112 = vsel %vm701, %v2086, 0
      %v2115 = vsel %vm701, %v2087, 0
      %v2118 = vsel %vm701, %v2088, 0
      %v2121 = vsel %vm701, %v2089, 0
      %2123 = vmatprep.subr.mxu0 0.0
      %2124 = vmatpush1.msra.mxu0 0.0
      %2125 = vmatprep.subr.mxu0 0.0
      %2126 = vmatpush1.msra.mxu0 0.0
      %2127 = vmatprep.subr.mxu0 0.0
      %2128 = vmatpush1.msra.mxu0 0.0
      %2129 = vmatprep.subr.mxu0 0.0
      %2130 = vmatpush1.msra.mxu0 0.0
      %2131 = vmatprep.subr.mxu0 0.0
      %2132 = vmatpush1.msra.mxu0 0.0
      %2133 = vmatprep.subr.mxu0 0.0
      %2134 = vmatpush1.msra.mxu0 0.0
      %2135 = vmatprep.subr.mxu0 0.0
      %2136 = vmatpush1.msra.mxu0 0.0
      %2137 = vmatprep.subr.mxu0 0.0
      %2138 = vmatpush1.msra.mxu0 0.0
      %2139 = vmatprep.subr.mxu0 0.0
      %2140 = vmatpush1.msra.mxu0 %v1756
      %2141 = vmatprep.subr.mxu0 0.0
      %2142 = vmatpush1.msra.mxu0 %v1751
      %2143 = vmatprep.subr.mxu0 0.0
      %2144 = vmatpush1.msra.mxu0 %v1746
      %2145 = vmatprep.subr.mxu0 0.0
      %2146 = vmatpush1.msra.mxu0 %v1741
      %2147 = vmatprep.subr.mxu0 0.0
      %2148 = vmatpush1.msra.mxu0 %v1736
      %2149 = vmatprep.subr.mxu0 0.0
      %2150 = vmatpush1.msra.mxu0 %v1731
      %2151 = vmatprep.subr.mxu0 0.0
      %2152 = vmatpush1.msra.mxu0 %v1726
      %2153 = vmatprep.subr.mxu0 0.0
      %2154 = vmatpush1.msra.mxu0 %v1721
      %2155 = vmatprep.subr.mxu0 0.0
      %2156 = vmatpush2.msra.mxu0 0.0
      %2157 = vmatprep.subr.mxu0 0.0
      %2158 = vmatpush2.msra.mxu0 0.0
      %2159 = vmatprep.subr.mxu0 0.0
      %2160 = vmatpush2.msra.mxu0 0.0
      %2161 = vmatprep.subr.mxu0 0.0
      %2162 = vmatpush2.msra.mxu0 0.0
      %2163 = vmatprep.subr.mxu0 0.0
      %2164 = vmatpush2.msra.mxu0 0.0
      %2165 = vmatprep.subr.mxu0 0.0
      %2166 = vmatpush2.msra.mxu0 0.0
      %2167 = vmatprep.subr.mxu0 0.0
      %2168 = vmatpush2.msra.mxu0 0.0
      %2169 = vmatprep.subr.mxu0 0.0
      %2170 = vmatpush2.msra.mxu0 0.0
      %2171 = vmatprep.subr.mxu0 0.0
      %2172 = vmatpush2.msra.mxu0 0.0
      %2173 = vmatprep.subr.mxu0 0.0
      %2174 = vmatpush2.msra.mxu0 0.0
      %2175 = vmatprep.subr.mxu0 0.0
      %2176 = vmatpush2.msra.mxu0 0.0
      %2177 = vmatprep.subr.mxu0 0.0
      %2178 = vmatpush2.msra.mxu0 0.0
      %2179 = vmatprep.subr.mxu0 0.0
      %2180 = vmatpush2.msra.mxu0 0.0
      %2181 = vmatprep.subr.mxu0 0.0
      %2182 = vmatpush2.msra.mxu0 0.0
      %2183 = vmatprep.subr.mxu0 0.0
      %2184 = vmatpush2.msra.mxu0 0.0
      %2185 = vmatprep.subr.mxu0 0.0
      %2186 = vmatpush2.msra.mxu0 0.0
      %2187 = vmatprep.mubr.f32.mxu0 0.0
      %2188 = vmatmul.mubr.f32.gmra.mxu0 %v2100
      %v2189 = vpop.f32.mrf.mxu0
      %v2190 = vadd.f32 %v2091, %v2189
      %v2191 = vpop.f32.mrf.mxu0
      %2192 = vmatprep.mubr.f32.mxu0 0.0
      %2193 = vmatmul.mubr.f32.gmra.mxu0 %v2103
      %v2194 = vpop.f32.mrf.mxu0
      %v2195 = vadd.f32 %v2092, %v2194
      %v2196 = vpop.f32.mrf.mxu0
      %2197 = vmatprep.mubr.f32.mxu0 0.0
      %2198 = vmatmul.mubr.f32.gmra.mxu0 %v2106
      %v2199 = vpop.f32.mrf.mxu0
      %v2200 = vadd.f32 %v2093, %v2199
      %v2201 = vpop.f32.mrf.mxu0
      %2202 = vmatprep.mubr.f32.mxu0 0.0
      %2203 = vmatmul.mubr.f32.gmra.mxu0 %v2109
      %v2204 = vpop.f32.mrf.mxu0
      %v2205 = vadd.f32 %v2094, %v2204
      %v2206 = vpop.f32.mrf.mxu0
      %2207 = vmatprep.mubr.f32.mxu0 0.0
      %2208 = vmatmul.mubr.f32.gmra.mxu0 %v2112
      %v2209 = vpop.f32.mrf.mxu0
      %v2210 = vadd.f32 %v2095, %v2209
      %v2211 = vpop.f32.mrf.mxu0
      %2212 = vmatprep.mubr.f32.mxu0 0.0
      %2213 = vmatmul.mubr.f32.gmra.mxu0 %v2115
      %v2214 = vpop.f32.mrf.mxu0
      %v2215 = vadd.f32 %v2096, %v2214
      %v2216 = vpop.f32.mrf.mxu0
      %2217 = vmatprep.mubr.f32.mxu0 0.0
      %2218 = vmatmul.mubr.f32.gmra.mxu0 %v2118
      %v2219 = vpop.f32.mrf.mxu0
      %v2220 = vadd.f32 %v2097, %v2219
      %v2221 = vpop.f32.mrf.mxu0
      %2222 = vmatprep.mubr.f32.mxu0 0.0
      %2223 = vmatmul.mubr.f32.gmra.mxu0 %v2121
      %v2224 = vpop.f32.mrf.mxu0
      %v2225 = vadd.f32 %v2098, %v2224
      %v2226 = vpop.f32.mrf.mxu0
      %2227 = vdwg.mxu0
      %s2228 = scalar_lea.vmem %s283, 128
      %2229 = vst.msk [vmem:[%s2228] sm:$0xff] %vm328, %v2190
      %2230 = vst.msk [vmem:[%s2228 + $0x8] sm:$0xff] %vm328, %v2195
      %2231 = vst.msk [vmem:[%s2228 + $0x10] sm:$0xff] %vm328, %v2200
      %2232 = vst.msk [vmem:[%s2228 + $0x18] sm:$0xff] %vm328, %v2205
      %2233 = vst.msk [vmem:[%s2228 + $0x20] sm:$0xff] %vm328, %v2210
      %2234 = vst.msk [vmem:[%s2228 + $0x28] sm:$0xff] %vm328, %v2215
      %2235 = vst.msk [vmem:[%s2228 + $0x30] sm:$0xff] %vm328, %v2220
      %2236 = vst.msk [vmem:[%s2228 + $0x38] sm:$0xff] %vm328, %v2225
      %s2237 = scalar_lea.vmem %s269, 48
      %v2238 = vld [vmem:[%s2237] sm:$0xff]
      %v2239 = vld [vmem:[%s2237 + $0x8] sm:$0xff]
      %2240 = vxpose.xlu0.b32.start [1/16] %v2238, 128
      %2241 = vxpose.xlu0.b32.cont [2/16] %v2239, 128
      %2242 = vxpose.xlu0.b32.cont [3/16] 0.0, 128
      %2243 = vxpose.xlu0.b32.cont [4/16] 0.0, 128
      %2244 = vxpose.xlu0.b32.cont [5/16] 0.0, 128
      %2245 = vxpose.xlu0.b32.cont [6/16] 0.0, 128
      %2246 = vxpose.xlu0.b32.cont [7/16] 0.0, 128
      %2247 = vxpose.xlu0.b32.cont [8/16] 0.0, 128
      %2248 = vxpose.xlu0.b32.cont [9/16] 0.0, 128
      %2249 = vxpose.xlu0.b32.cont [10/16] 0.0, 128
      %2250 = vxpose.xlu0.b32.cont [11/16] 0.0, 128
      %2251 = vxpose.xlu0.b32.cont [12/16] 0.0, 128
      %2252 = vxpose.xlu0.b32.cont [13/16] 0.0, 128
      %2253 = vxpose.xlu0.b32.cont [14/16] 0.0, 128
      %2254 = vxpose.xlu0.b32.cont [15/16] 0.0, 128
      %2255 = vxpose.xlu0.b32.end [16/16] 0.0, 128
      %v2256 = vpop.trf.xlu0
      %v2257 = vpop.trf.xlu0
      %v2258 = vpop.trf.xlu0
      %v2259 = vpop.trf.xlu0
      %v2260 = vpop.trf.xlu0
      %v2261 = vpop.trf.xlu0
      %v2262 = vpop.trf.xlu0
      %v2263 = vpop.trf.xlu0
      %v2264 = vpop.trf.xlu0
      %v2265 = vpop.trf.xlu0
      %v2266 = vpop.trf.xlu0
      %v2267 = vpop.trf.xlu0
      %v2268 = vpop.trf.xlu0
      %v2269 = vpop.trf.xlu0
      %v2270 = vpop.trf.xlu0
      %v2271 = vpop.trf.xlu0
      %v2272 = vld [vmem:[%s2] sm:$0xff]
      %v2273 = vld [vmem:[%s2 + $0x8] sm:$0xff]
      %v2274 = vld [vmem:[%s3] sm:$0x1]
      %v2276 = vlaneseq
      %v2277 = vshrl.u32 %v2276, 7
      %v2278 = vsub.s32 0, %v2277
      %v2279 = vrot.slane %v2274, %v2278
      %v2282 = vsel %vm328, %v2256, 0
      %v2285 = vsel %vm328, %v2257, 0
      %v2288 = vsel %vm328, %v2258, 0
      %v2291 = vsel %vm328, %v2259, 0
      %v2294 = vsel %vm328, %v2260, 0
      %v2297 = vsel %vm328, %v2261, 0
      %v2300 = vsel %vm328, %v2262, 0
      %v2303 = vsel %vm328, %v2263, 0
      %2305 = vmatprep.subr.mxu0 0.0
      %2306 = vmatpush1.msra.mxu0 0.0
      %2307 = vmatprep.subr.mxu0 0.0
      %2308 = vmatpush1.msra.mxu0 0.0
      %2309 = vmatprep.subr.mxu0 0.0
      %2310 = vmatpush1.msra.mxu0 0.0
      %2311 = vmatprep.subr.mxu0 0.0
      %2312 = vmatpush1.msra.mxu0 0.0
      %2313 = vmatprep.subr.mxu0 0.0
      %2314 = vmatpush1.msra.mxu0 0.0
      %2315 = vmatprep.subr.mxu0 0.0
      %2316 = vmatpush1.msra.mxu0 0.0
      %2317 = vmatprep.subr.mxu0 0.0
      %2318 = vmatpush1.msra.mxu0 0.0
      %2319 = vmatprep.subr.mxu0 0.0
      %2320 = vmatpush1.msra.mxu0 0.0
      %2321 = vmatprep.subr.mxu0 0.0
      %2322 = vmatpush1.msra.mxu0 0.0
      %2323 = vmatprep.subr.mxu0 0.0
      %2324 = vmatpush1.msra.mxu0 0.0
      %2325 = vmatprep.subr.mxu0 0.0
      %2326 = vmatpush1.msra.mxu0 0.0
      %2327 = vmatprep.subr.mxu0 0.0
      %2328 = vmatpush1.msra.mxu0 0.0
      %2329 = vmatprep.subr.mxu0 0.0
      %2330 = vmatpush1.msra.mxu0 0.0
      %2331 = vmatprep.subr.mxu0 0.0
      %2332 = vmatpush1.msra.mxu0 0.0
      %2333 = vmatprep.subr.mxu0 0.0
      %2334 = vmatpush1.msra.mxu0 %v2273
      %2335 = vmatprep.subr.mxu0 0.0
      %2336 = vmatpush1.msra.mxu0 %v2272
      %2337 = vmatprep.subr.mxu0 0.0
      %2338 = vmatpush2.msra.mxu0 0.0
      %2339 = vmatprep.subr.mxu0 0.0
      %2340 = vmatpush2.msra.mxu0 0.0
      %2341 = vmatprep.subr.mxu0 0.0
      %2342 = vmatpush2.msra.mxu0 0.0
      %2343 = vmatprep.subr.mxu0 0.0
      %2344 = vmatpush2.msra.mxu0 0.0
      %2345 = vmatprep.subr.mxu0 0.0
      %2346 = vmatpush2.msra.mxu0 0.0
      %2347 = vmatprep.subr.mxu0 0.0
      %2348 = vmatpush2.msra.mxu0 0.0
      %2349 = vmatprep.subr.mxu0 0.0
      %2350 = vmatpush2.msra.mxu0 0.0
      %2351 = vmatprep.subr.mxu0 0.0
      %2352 = vmatpush2.msra.mxu0 0.0
      %2353 = vmatprep.subr.mxu0 0.0
      %2354 = vmatpush2.msra.mxu0 0.0
      %2355 = vmatprep.subr.mxu0 0.0
      %2356 = vmatpush2.msra.mxu0 0.0
      %2357 = vmatprep.subr.mxu0 0.0
      %2358 = vmatpush2.msra.mxu0 0.0
      %2359 = vmatprep.subr.mxu0 0.0
      %2360 = vmatpush2.msra.mxu0 0.0
      %2361 = vmatprep.subr.mxu0 0.0
      %2362 = vmatpush2.msra.mxu0 0.0
      %2363 = vmatprep.subr.mxu0 0.0
      %2364 = vmatpush2.msra.mxu0 0.0
      %2365 = vmatprep.subr.mxu0 0.0
      %2366 = vmatpush2.msra.mxu0 0.0
      %2367 = vmatprep.subr.mxu0 0.0
      %2368 = vmatpush2.msra.mxu0 0.0
      %2369 = vmatprep.mubr.f32.mxu0 0.0
      %2370 = vmatmul.mubr.f32.gmra.mxu0 %v2282
      %v2371 = vpop.f32.mrf.mxu0
      %v2372 = vadd.f32 %v2279, %v2371
      %v2373 = vpop.f32.mrf.mxu0
      %2374 = vmatprep.mubr.f32.mxu0 0.0
      %2375 = vmatmul.mubr.f32.gmra.mxu0 %v2285
      %v2376 = vpop.f32.mrf.mxu0
      %v2377 = vadd.f32 %v2279, %v2376
      %v2378 = vpop.f32.mrf.mxu0
      %2379 = vmatprep.mubr.f32.mxu0 0.0
      %2380 = vmatmul.mubr.f32.gmra.mxu0 %v2288
      %v2381 = vpop.f32.mrf.mxu0
      %v2382 = vadd.f32 %v2279, %v2381
      %v2383 = vpop.f32.mrf.mxu0
      %2384 = vmatprep.mubr.f32.mxu0 0.0
      %2385 = vmatmul.mubr.f32.gmra.mxu0 %v2291
      %v2386 = vpop.f32.mrf.mxu0
      %v2387 = vadd.f32 %v2279, %v2386
      %v2388 = vpop.f32.mrf.mxu0
      %2389 = vmatprep.mubr.f32.mxu0 0.0
      %2390 = vmatmul.mubr.f32.gmra.mxu0 %v2294
      %v2391 = vpop.f32.mrf.mxu0
      %v2392 = vadd.f32 %v2279, %v2391
      %v2393 = vpop.f32.mrf.mxu0
      %2394 = vmatprep.mubr.f32.mxu0 0.0
      %2395 = vmatmul.mubr.f32.gmra.mxu0 %v2297
      %v2396 = vpop.f32.mrf.mxu0
      %v2397 = vadd.f32 %v2279, %v2396
      %v2398 = vpop.f32.mrf.mxu0
      %2399 = vmatprep.mubr.f32.mxu0 0.0
      %2400 = vmatmul.mubr.f32.gmra.mxu0 %v2300
      %v2401 = vpop.f32.mrf.mxu0
      %v2402 = vadd.f32 %v2279, %v2401
      %v2403 = vpop.f32.mrf.mxu0
      %2404 = vmatprep.mubr.f32.mxu0 0.0
      %2405 = vmatmul.mubr.f32.gmra.mxu0 %v2303
      %v2406 = vpop.f32.mrf.mxu0
      %v2407 = vadd.f32 %v2279, %v2406
      %v2408 = vpop.f32.mrf.mxu0
      %2409 = vdwg.mxu0
      %v2410 = vld [vmem:[%s4] sm:$0xff]
      %v2411 = vld [vmem:[%s4 + $0x8] sm:$0xff]
      %v2412 = vld [vmem:[%s5] sm:$0x1]
      %v2414 = vlaneseq
      %v2415 = vshrl.u32 %v2414, 7
      %v2416 = vsub.s32 0, %v2415
      %v2417 = vrot.slane %v2412, %v2416
      %2419 = vmatprep.subr.mxu0 0.0
      %2420 = vmatpush1.msra.mxu0 0.0
      %2421 = vmatprep.subr.mxu0 0.0
      %2422 = vmatpush1.msra.mxu0 0.0
      %2423 = vmatprep.subr.mxu0 0.0
      %2424 = vmatpush1.msra.mxu0 0.0
      %2425 = vmatprep.subr.mxu0 0.0
      %2426 = vmatpush1.msra.mxu0 0.0
      %2427 = vmatprep.subr.mxu0 0.0
      %2428 = vmatpush1.msra.mxu0 0.0
      %2429 = vmatprep.subr.mxu0 0.0
      %2430 = vmatpush1.msra.mxu0 0.0
      %2431 = vmatprep.subr.mxu0 0.0
      %2432 = vmatpush1.msra.mxu0 0.0
      %2433 = vmatprep.subr.mxu0 0.0
      %2434 = vmatpush1.msra.mxu0 0.0
      %2435 = vmatprep.subr.mxu0 0.0
      %2436 = vmatpush1.msra.mxu0 0.0
      %2437 = vmatprep.subr.mxu0 0.0
      %2438 = vmatpush1.msra.mxu0 0.0
      %2439 = vmatprep.subr.mxu0 0.0
      %2440 = vmatpush1.msra.mxu0 0.0
      %2441 = vmatprep.subr.mxu0 0.0
      %2442 = vmatpush1.msra.mxu0 0.0
      %2443 = vmatprep.subr.mxu0 0.0
      %2444 = vmatpush1.msra.mxu0 0.0
      %2445 = vmatprep.subr.mxu0 0.0
      %2446 = vmatpush1.msra.mxu0 0.0
      %2447 = vmatprep.subr.mxu0 0.0
      %2448 = vmatpush1.msra.mxu0 %v2411
      %2449 = vmatprep.subr.mxu0 0.0
      %2450 = vmatpush1.msra.mxu0 %v2410
      %2451 = vmatprep.subr.mxu0 0.0
      %2452 = vmatpush2.msra.mxu0 0.0
      %2453 = vmatprep.subr.mxu0 0.0
      %2454 = vmatpush2.msra.mxu0 0.0
      %2455 = vmatprep.subr.mxu0 0.0
      %2456 = vmatpush2.msra.mxu0 0.0
      %2457 = vmatprep.subr.mxu0 0.0
      %2458 = vmatpush2.msra.mxu0 0.0
      %2459 = vmatprep.subr.mxu0 0.0
      %2460 = vmatpush2.msra.mxu0 0.0
      %2461 = vmatprep.subr.mxu0 0.0
      %2462 = vmatpush2.msra.mxu0 0.0
      %2463 = vmatprep.subr.mxu0 0.0
      %2464 = vmatpush2.msra.mxu0 0.0
      %2465 = vmatprep.subr.mxu0 0.0
      %2466 = vmatpush2.msra.mxu0 0.0
      %2467 = vmatprep.subr.mxu0 0.0
      %2468 = vmatpush2.msra.mxu0 0.0
      %2469 = vmatprep.subr.mxu0 0.0
      %2470 = vmatpush2.msra.mxu0 0.0
      %2471 = vmatprep.subr.mxu0 0.0
      %2472 = vmatpush2.msra.mxu0 0.0
      %2473 = vmatprep.subr.mxu0 0.0
      %2474 = vmatpush2.msra.mxu0 0.0
      %2475 = vmatprep.subr.mxu0 0.0
      %2476 = vmatpush2.msra.mxu0 0.0
      %2477 = vmatprep.subr.mxu0 0.0
      %2478 = vmatpush2.msra.mxu0 0.0
      %2479 = vmatprep.subr.mxu0 0.0
      %2480 = vmatpush2.msra.mxu0 0.0
      %2481 = vmatprep.subr.mxu0 0.0
      %2482 = vmatpush2.msra.mxu0 0.0
      %2483 = vmatprep.mubr.f32.mxu0 0.0
      %2484 = vmatmul.mubr.f32.gmra.mxu0 %v2282
      %v2485 = vpop.f32.mrf.mxu0
      %v2486 = vadd.f32 %v2417, %v2485
      %v2487 = vpop.f32.mrf.mxu0
      %2488 = vmatprep.mubr.f32.mxu0 0.0
      %2489 = vmatmul.mubr.f32.gmra.mxu0 %v2285
      %v2490 = vpop.f32.mrf.mxu0
      %v2491 = vadd.f32 %v2417, %v2490
      %v2492 = vpop.f32.mrf.mxu0
      %2493 = vmatprep.mubr.f32.mxu0 0.0
      %2494 = vmatmul.mubr.f32.gmra.mxu0 %v2288
      %v2495 = vpop.f32.mrf.mxu0
      %v2496 = vadd.f32 %v2417, %v2495
      %v2497 = vpop.f32.mrf.mxu0
      %2498 = vmatprep.mubr.f32.mxu0 0.0
      %2499 = vmatmul.mubr.f32.gmra.mxu0 %v2291
      %v2500 = vpop.f32.mrf.mxu0
      %v2501 = vadd.f32 %v2417, %v2500
      %v2502 = vpop.f32.mrf.mxu0
      %2503 = vmatprep.mubr.f32.mxu0 0.0
      %2504 = vmatmul.mubr.f32.gmra.mxu0 %v2294
      %v2505 = vpop.f32.mrf.mxu0
      %v2506 = vadd.f32 %v2417, %v2505
      %v2507 = vpop.f32.mrf.mxu0
      %2508 = vmatprep.mubr.f32.mxu0 0.0
      %2509 = vmatmul.mubr.f32.gmra.mxu0 %v2297
      %v2510 = vpop.f32.mrf.mxu0
      %v2511 = vadd.f32 %v2417, %v2510
      %v2512 = vpop.f32.mrf.mxu0
      %2513 = vmatprep.mubr.f32.mxu0 0.0
      %2514 = vmatmul.mubr.f32.gmra.mxu0 %v2300
      %v2515 = vpop.f32.mrf.mxu0
      %v2516 = vadd.f32 %v2417, %v2515
      %v2517 = vpop.f32.mrf.mxu0
      %2518 = vmatprep.mubr.f32.mxu0 0.0
      %2519 = vmatmul.mubr.f32.gmra.mxu0 %v2303
      %v2520 = vpop.f32.mrf.mxu0
      %v2521 = vadd.f32 %v2417, %v2520
      %v2522 = vpop.f32.mrf.mxu0
      %2523 = vdwg.mxu0
      %v2525 = vsel %vm328, %v2486, 0
      %v2528 = vsel %vm328, %v2491, 0
      %v2531 = vsel %vm328, %v2496, 0
      %v2534 = vsel %vm328, %v2501, 0
      %v2537 = vsel %vm328, %v2506, 0
      %v2540 = vsel %vm328, %v2511, 0
      %v2543 = vsel %vm328, %v2516, 0
      %v2546 = vsel %vm328, %v2521, 0
      %2548 = vmatprep.subr.mxu0 0.0
      %2549 = vmatpush1.msra.mxu0 0.0
      %2550 = vmatprep.subr.mxu0 0.0
      %2551 = vmatpush1.msra.mxu0 0.0
      %2552 = vmatprep.subr.mxu0 0.0
      %2553 = vmatpush1.msra.mxu0 0.0
      %2554 = vmatprep.subr.mxu0 0.0
      %2555 = vmatpush1.msra.mxu0 0.0
      %2556 = vmatprep.subr.mxu0 0.0
      %2557 = vmatpush1.msra.mxu0 0.0
      %2558 = vmatprep.subr.mxu0 0.0
      %2559 = vmatpush1.msra.mxu0 0.0
      %2560 = vmatprep.subr.mxu0 0.0
      %2561 = vmatpush1.msra.mxu0 0.0
      %2562 = vmatprep.subr.mxu0 0.0
      %2563 = vmatpush1.msra.mxu0 0.0
      %2564 = vmatprep.subr.mxu0 0.0
      %2565 = vmatpush1.msra.mxu0 0.0
      %2566 = vmatprep.subr.mxu0 0.0
      %2567 = vmatpush1.msra.mxu0 0.0
      %2568 = vmatprep.subr.mxu0 0.0
      %2569 = vmatpush1.msra.mxu0 0.0
      %2570 = vmatprep.subr.mxu0 0.0
      %2571 = vmatpush1.msra.mxu0 0.0
      %2572 = vmatprep.subr.mxu0 0.0
      %2573 = vmatpush1.msra.mxu0 0.0
      %2574 = vmatprep.subr.mxu0 0.0
      %2575 = vmatpush1.msra.mxu0 0.0
      %2576 = vmatprep.subr.mxu0 0.0
      %2577 = vmatpush1.msra.mxu0 %v2239
      %2578 = vmatprep.subr.mxu0 0.0
      %2579 = vmatpush1.msra.mxu0 %v2238
      %2580 = vmatprep.subr.mxu0 0.0
      %2581 = vmatpush2.msra.mxu0 0.0
      %2582 = vmatprep.subr.mxu0 0.0
      %2583 = vmatpush2.msra.mxu0 0.0
      %2584 = vmatprep.subr.mxu0 0.0
      %2585 = vmatpush2.msra.mxu0 0.0
      %2586 = vmatprep.subr.mxu0 0.0
      %2587 = vmatpush2.msra.mxu0 0.0
      %2588 = vmatprep.subr.mxu0 0.0
      %2589 = vmatpush2.msra.mxu0 0.0
      %2590 = vmatprep.subr.mxu0 0.0
      %2591 = vmatpush2.msra.mxu0 0.0
      %2592 = vmatprep.subr.mxu0 0.0
      %2593 = vmatpush2.msra.mxu0 0.0
      %2594 = vmatprep.subr.mxu0 0.0
      %2595 = vmatpush2.msra.mxu0 0.0
      %2596 = vmatprep.subr.mxu0 0.0
      %2597 = vmatpush2.msra.mxu0 0.0
      %2598 = vmatprep.subr.mxu0 0.0
      %2599 = vmatpush2.msra.mxu0 0.0
      %2600 = vmatprep.subr.mxu0 0.0
      %2601 = vmatpush2.msra.mxu0 0.0
      %2602 = vmatprep.subr.mxu0 0.0
      %2603 = vmatpush2.msra.mxu0 0.0
      %2604 = vmatprep.subr.mxu0 0.0
      %2605 = vmatpush2.msra.mxu0 0.0
      %2606 = vmatprep.subr.mxu0 0.0
      %2607 = vmatpush2.msra.mxu0 0.0
      %2608 = vmatprep.subr.mxu0 0.0
      %2609 = vmatpush2.msra.mxu0 0.0
      %2610 = vmatprep.subr.mxu0 0.0
      %2611 = vmatpush2.msra.mxu0 0.0
      %2612 = vmatprep.mubr.f32.mxu0 0.0
      %2613 = vmatmul.mubr.f32.gmra.mxu0 %v2525
      %v2614 = vpop.f32.mrf.mxu0
      %v2615 = vadd.f32 0.0, %v2614
      %v2616 = vpop.f32.mrf.mxu0
      %2617 = vmatprep.mubr.f32.mxu0 0.0
      %2618 = vmatmul.mubr.f32.gmra.mxu0 %v2528
      %v2619 = vpop.f32.mrf.mxu0
      %v2620 = vadd.f32 0.0, %v2619
      %v2621 = vpop.f32.mrf.mxu0
      %2622 = vmatprep.mubr.f32.mxu0 0.0
      %2623 = vmatmul.mubr.f32.gmra.mxu0 %v2531
      %v2624 = vpop.f32.mrf.mxu0
      %v2625 = vadd.f32 0.0, %v2624
      %v2626 = vpop.f32.mrf.mxu0
      %2627 = vmatprep.mubr.f32.mxu0 0.0
      %2628 = vmatmul.mubr.f32.gmra.mxu0 %v2534
      %v2629 = vpop.f32.mrf.mxu0
      %v2630 = vadd.f32 0.0, %v2629
      %v2631 = vpop.f32.mrf.mxu0
      %2632 = vmatprep.mubr.f32.mxu0 0.0
      %2633 = vmatmul.mubr.f32.gmra.mxu0 %v2537
      %v2634 = vpop.f32.mrf.mxu0
      %v2635 = vadd.f32 0.0, %v2634
      %v2636 = vpop.f32.mrf.mxu0
      %2637 = vmatprep.mubr.f32.mxu0 0.0
      %2638 = vmatmul.mubr.f32.gmra.mxu0 %v2540
      %v2639 = vpop.f32.mrf.mxu0
      %v2640 = vadd.f32 0.0, %v2639
      %v2641 = vpop.f32.mrf.mxu0
      %2642 = vmatprep.mubr.f32.mxu0 0.0
      %2643 = vmatmul.mubr.f32.gmra.mxu0 %v2543
      %v2644 = vpop.f32.mrf.mxu0
      %v2645 = vadd.f32 0.0, %v2644
      %v2646 = vpop.f32.mrf.mxu0
      %2647 = vmatprep.mubr.f32.mxu0 0.0
      %2648 = vmatmul.mubr.f32.gmra.mxu0 %v2546
      %v2649 = vpop.f32.mrf.mxu0
      %v2650 = vadd.f32 0.0, %v2649
      %v2651 = vpop.f32.mrf.mxu0
      %2652 = vdwg.mxu0
      %v2653 = vsel %vm701, %v2615, -inf
      %2654 = vmax.xlane.f32.xlu0 %v2653
      %v2655 = vpop.xlane.xlu0 %2654
      %v2656 = vsel %vm701, %v2620, -inf
      %2657 = vmax.xlane.f32.xlu0 %v2656
      %v2658 = vpop.xlane.xlu0 %2657
      %v2659 = vsel %vm701, %v2625, -inf
      %2660 = vmax.xlane.f32.xlu0 %v2659
      %v2661 = vpop.xlane.xlu0 %2660
      %v2662 = vsel %vm701, %v2630, -inf
      %2663 = vmax.xlane.f32.xlu0 %v2662
      %v2664 = vpop.xlane.xlu0 %2663
      %v2665 = vsel %vm701, %v2635, -inf
      %2666 = vmax.xlane.f32.xlu0 %v2665
      %v2667 = vpop.xlane.xlu0 %2666
      %v2668 = vsel %vm701, %v2640, -inf
      %2669 = vmax.xlane.f32.xlu0 %v2668
      %v2670 = vpop.xlane.xlu0 %2669
      %v2671 = vsel %vm701, %v2645, -inf
      %2672 = vmax.xlane.f32.xlu0 %v2671
      %v2673 = vpop.xlane.xlu0 %2672
      %v2674 = vsel %vm701, %v2650, -inf
      %2675 = vmax.xlane.f32.xlu0 %v2674
      %v2676 = vpop.xlane.xlu0 %2675
      %v2677 = vsub.f32 %v2615, %v2655
      %v2678 = vsub.f32 %v2620, %v2658
      %v2679 = vsub.f32 %v2625, %v2661
      %v2680 = vsub.f32 %v2630, %v2664
      %v2681 = vsub.f32 %v2635, %v2667
      %v2682 = vsub.f32 %v2640, %v2670
      %v2683 = vsub.f32 %v2645, %v2673
      %v2684 = vsub.f32 %v2650, %v2676
      %v2685 = vmul.f32 %v2677, 1.442695
      %v2686 = vpow.pop %v2685
      %v2687 = vmul.f32 %v2678, 1.442695
      %v2688 = vpow.pop %v2687
      %v2689 = vmul.f32 %v2679, 1.442695
      %v2690 = vpow.pop %v2689
      %v2691 = vmul.f32 %v2680, 1.442695
      %v2692 = vpow.pop %v2691
      %v2693 = vmul.f32 %v2681, 1.442695
      %v2694 = vpow.pop %v2693
      %v2695 = vmul.f32 %v2682, 1.442695
      %v2696 = vpow.pop %v2695
      %v2697 = vmul.f32 %v2683, 1.442695
      %v2698 = vpow.pop %v2697
      %v2699 = vmul.f32 %v2684, 1.442695
      %v2700 = vpow.pop %v2699
      %v2701 = vsel %vm701, %v2686, 0.0
      %2702 = vadd.xlane.f32.xlu0 %v2701
      %v2703 = vpop.xlane.xlu0 %2702
      %v2704 = vsel %vm701, %v2688, 0.0
      %2705 = vadd.xlane.f32.xlu0 %v2704
      %v2706 = vpop.xlane.xlu0 %2705
      %v2707 = vsel %vm701, %v2690, 0.0
      %2708 = vadd.xlane.f32.xlu0 %v2707
      %v2709 = vpop.xlane.xlu0 %2708
      %v2710 = vsel %vm701, %v2692, 0.0
      %2711 = vadd.xlane.f32.xlu0 %v2710
      %v2712 = vpop.xlane.xlu0 %2711
      %v2713 = vsel %vm701, %v2694, 0.0
      %2714 = vadd.xlane.f32.xlu0 %v2713
      %v2715 = vpop.xlane.xlu0 %2714
      %v2716 = vsel %vm701, %v2696, 0.0
      %2717 = vadd.xlane.f32.xlu0 %v2716
      %v2718 = vpop.xlane.xlu0 %2717
      %v2719 = vsel %vm701, %v2698, 0.0
      %2720 = vadd.xlane.f32.xlu0 %v2719
      %v2721 = vpop.xlane.xlu0 %2720
      %v2722 = vsel %vm701, %v2700, 0.0
      %2723 = vadd.xlane.f32.xlu0 %v2722
      %v2724 = vpop.xlane.xlu0 %2723
      %v2725 = vrcp.pop %v2703
      %v2726 = vrcp.pop %v2706
      %v2727 = vrcp.pop %v2709
      %v2728 = vrcp.pop %v2712
      %v2729 = vrcp.pop %v2715
      %v2730 = vrcp.pop %v2718
      %v2731 = vrcp.pop %v2721
      %v2732 = vrcp.pop %v2724
      %v2733 = vmul.f32 %v2686, %v2725
      %v2734 = vmul.f32 %v2688, %v2726
      %v2735 = vmul.f32 %v2690, %v2727
      %v2736 = vmul.f32 %v2692, %v2728
      %v2737 = vmul.f32 %v2694, %v2729
      %v2738 = vmul.f32 %v2696, %v2730
      %v2739 = vmul.f32 %v2698, %v2731
      %v2740 = vmul.f32 %v2700, %v2732
      %s2741 = scalar_lea.vmem %s276, 192
      %v2742 = vld [vmem:[%s2741] sm:$0xff]
      %v2743 = vld [vmem:[%s2741 + $0x8] sm:$0xff]
      %v2744 = vld [vmem:[%s2741 + $0x10] sm:$0xff]
      %v2745 = vld [vmem:[%s2741 + $0x18] sm:$0xff]
      %v2746 = vld [vmem:[%s2741 + $0x20] sm:$0xff]
      %v2747 = vld [vmem:[%s2741 + $0x28] sm:$0xff]
      %v2748 = vld [vmem:[%s2741 + $0x30] sm:$0xff]
      %v2749 = vld [vmem:[%s2741 + $0x38] sm:$0xff]
      %v2751 = vsel %vm701, %v2733, 0
      %v2754 = vsel %vm701, %v2734, 0
      %v2757 = vsel %vm701, %v2735, 0
      %v2760 = vsel %vm701, %v2736, 0
      %v2763 = vsel %vm701, %v2737, 0
      %v2766 = vsel %vm701, %v2738, 0
      %v2769 = vsel %vm701, %v2739, 0
      %v2772 = vsel %vm701, %v2740, 0
      %2774 = vmatprep.subr.mxu0 0.0
      %2775 = vmatpush1.msra.mxu0 0.0
      %2776 = vmatprep.subr.mxu0 0.0
      %2777 = vmatpush1.msra.mxu0 0.0
      %2778 = vmatprep.subr.mxu0 0.0
      %2779 = vmatpush1.msra.mxu0 0.0
      %2780 = vmatprep.subr.mxu0 0.0
      %2781 = vmatpush1.msra.mxu0 0.0
      %2782 = vmatprep.subr.mxu0 0.0
      %2783 = vmatpush1.msra.mxu0 0.0
      %2784 = vmatprep.subr.mxu0 0.0
      %2785 = vmatpush1.msra.mxu0 0.0
      %2786 = vmatprep.subr.mxu0 0.0
      %2787 = vmatpush1.msra.mxu0 0.0
      %2788 = vmatprep.subr.mxu0 0.0
      %2789 = vmatpush1.msra.mxu0 0.0
      %2790 = vmatprep.subr.mxu0 0.0
      %2791 = vmatpush1.msra.mxu0 %v2407
      %2792 = vmatprep.subr.mxu0 0.0
      %2793 = vmatpush1.msra.mxu0 %v2402
      %2794 = vmatprep.subr.mxu0 0.0
      %2795 = vmatpush1.msra.mxu0 %v2397
      %2796 = vmatprep.subr.mxu0 0.0
      %2797 = vmatpush1.msra.mxu0 %v2392
      %2798 = vmatprep.subr.mxu0 0.0
      %2799 = vmatpush1.msra.mxu0 %v2387
      %2800 = vmatprep.subr.mxu0 0.0
      %2801 = vmatpush1.msra.mxu0 %v2382
      %2802 = vmatprep.subr.mxu0 0.0
      %2803 = vmatpush1.msra.mxu0 %v2377
      %2804 = vmatprep.subr.mxu0 0.0
      %2805 = vmatpush1.msra.mxu0 %v2372
      %2806 = vmatprep.subr.mxu0 0.0
      %2807 = vmatpush2.msra.mxu0 0.0
      %2808 = vmatprep.subr.mxu0 0.0
      %2809 = vmatpush2.msra.mxu0 0.0
      %2810 = vmatprep.subr.mxu0 0.0
      %2811 = vmatpush2.msra.mxu0 0.0
      %2812 = vmatprep.subr.mxu0 0.0
      %2813 = vmatpush2.msra.mxu0 0.0
      %2814 = vmatprep.subr.mxu0 0.0
      %2815 = vmatpush2.msra.mxu0 0.0
      %2816 = vmatprep.subr.mxu0 0.0
      %2817 = vmatpush2.msra.mxu0 0.0
      %2818 = vmatprep.subr.mxu0 0.0
      %2819 = vmatpush2.msra.mxu0 0.0
      %2820 = vmatprep.subr.mxu0 0.0
      %2821 = vmatpush2.msra.mxu0 0.0
      %2822 = vmatprep.subr.mxu0 0.0
      %2823 = vmatpush2.msra.mxu0 0.0
      %2824 = vmatprep.subr.mxu0 0.0
      %2825 = vmatpush2.msra.mxu0 0.0
      %2826 = vmatprep.subr.mxu0 0.0
      %2827 = vmatpush2.msra.mxu0 0.0
      %2828 = vmatprep.subr.mxu0 0.0
      %2829 = vmatpush2.msra.mxu0 0.0
      %2830 = vmatprep.subr.mxu0 0.0
      %2831 = vmatpush2.msra.mxu0 0.0
      %2832 = vmatprep.subr.mxu0 0.0
      %2833 = vmatpush2.msra.mxu0 0.0
      %2834 = vmatprep.subr.mxu0 0.0
      %2835 = vmatpush2.msra.mxu0 0.0
      %2836 = vmatprep.subr.mxu0 0.0
      %2837 = vmatpush2.msra.mxu0 0.0
      %2838 = vmatprep.mubr.f32.mxu0 0.0
      %2839 = vmatmul.mubr.f32.gmra.mxu0 %v2751
      %v2840 = vpop.f32.mrf.mxu0
      %v2841 = vadd.f32 %v2742, %v2840
      %v2842 = vpop.f32.mrf.mxu0
      %2843 = vmatprep.mubr.f32.mxu0 0.0
      %2844 = vmatmul.mubr.f32.gmra.mxu0 %v2754
      %v2845 = vpop.f32.mrf.mxu0
      %v2846 = vadd.f32 %v2743, %v2845
      %v2847 = vpop.f32.mrf.mxu0
      %2848 = vmatprep.mubr.f32.mxu0 0.0
      %2849 = vmatmul.mubr.f32.gmra.mxu0 %v2757
      %v2850 = vpop.f32.mrf.mxu0
      %v2851 = vadd.f32 %v2744, %v2850
      %v2852 = vpop.f32.mrf.mxu0
      %2853 = vmatprep.mubr.f32.mxu0 0.0
      %2854 = vmatmul.mubr.f32.gmra.mxu0 %v2760
      %v2855 = vpop.f32.mrf.mxu0
      %v2856 = vadd.f32 %v2745, %v2855
      %v2857 = vpop.f32.mrf.mxu0
      %2858 = vmatprep.mubr.f32.mxu0 0.0
      %2859 = vmatmul.mubr.f32.gmra.mxu0 %v2763
      %v2860 = vpop.f32.mrf.mxu0
      %v2861 = vadd.f32 %v2746, %v2860
      %v2862 = vpop.f32.mrf.mxu0
      %2863 = vmatprep.mubr.f32.mxu0 0.0
      %2864 = vmatmul.mubr.f32.gmra.mxu0 %v2766
      %v2865 = vpop.f32.mrf.mxu0
      %v2866 = vadd.f32 %v2747, %v2865
      %v2867 = vpop.f32.mrf.mxu0
      %2868 = vmatprep.mubr.f32.mxu0 0.0
      %2869 = vmatmul.mubr.f32.gmra.mxu0 %v2769
      %v2870 = vpop.f32.mrf.mxu0
      %v2871 = vadd.f32 %v2748, %v2870
      %v2872 = vpop.f32.mrf.mxu0
      %2873 = vmatprep.mubr.f32.mxu0 0.0
      %2874 = vmatmul.mubr.f32.gmra.mxu0 %v2772
      %v2875 = vpop.f32.mrf.mxu0
      %v2876 = vadd.f32 %v2749, %v2875
      %v2877 = vpop.f32.mrf.mxu0
      %2878 = vdwg.mxu0
      %s2879 = scalar_lea.vmem %s283, 192
      %2880 = vst.msk [vmem:[%s2879] sm:$0xff] %vm328, %v2841
      %2881 = vst.msk [vmem:[%s2879 + $0x8] sm:$0xff] %vm328, %v2846
      %2882 = vst.msk [vmem:[%s2879 + $0x10] sm:$0xff] %vm328, %v2851
      %2883 = vst.msk [vmem:[%s2879 + $0x18] sm:$0xff] %vm328, %v2856
      %2884 = vst.msk [vmem:[%s2879 + $0x20] sm:$0xff] %vm328, %v2861
      %2885 = vst.msk [vmem:[%s2879 + $0x28] sm:$0xff] %vm328, %v2866
      %2886 = vst.msk [vmem:[%s2879 + $0x30] sm:$0xff] %vm328, %v2871
      %2887 = vst.msk [vmem:[%s2879 + $0x38] sm:$0xff] %vm328, %v2876
      %s2888 = smul.u32 4, %s17
      %p2889 = scmp.lt.s32.totalorder %s2888, 7
      %s2890 = scalar_select %p2889, %s2888, 7
      %s2891 = smul.addr %s2890, 8
      %s2892 = smul.addr %s2891, 8
      %s2893 = scalar_lea.vmem %s6, %s2892
      // Predicated region
      $region45: #{tpu_custom_call.1} parent=43 // pred_check
        %p2894 = pneg %p171
      $region46: #{tpu_custom_call.1} parent=43 // pred_check_branch
        %2896 = sbr.rel (%p2894) target = $region48
      $region47: #{tpu_custom_call.1} parent=43 // pred_region
        %s2897 = smul.u32 4, %s17
      $region48: #{tpu_custom_call.1} parent=43 // pred_fallthru
        _
    $region44: #{tpu_custom_call.1} parent=5 // pred_fallthru
      _
    %p2898 = scmp.le.s32.totalorder 2, %s12
    // Predicated region
    $region49: #{tpu_custom_call.1} parent=5 // pred_check
      %p2899 = pneg %p2898
    $region50: #{tpu_custom_call.1} parent=5 // pred_check_branch
      %2901 = sbr.rel (%p2899) target = $region52
    $region51: #{tpu_custom_call.1} parent=5 // pred_region
      %s2902 = ssub.s32 %s12, 2
      // Predicated region
      $region53: #{tpu_custom_call.1} parent=51 // pred_check
        %p2903 = pneg %p177
      $region54: #{tpu_custom_call.1} parent=51 // pred_check_branch
        %2905 = sbr.rel (%p2903) target = $region56
      $region55: #{tpu_custom_call.1} parent=51 // pred_region
        %s2906 = smul.u32 4, %s18
        %p2907 = scmp.lt.s32.totalorder %s2906, 7
        %s2908 = scalar_select %p2907, %s2906, 7
        %s2909 = smul.addr %s2908, 8
        %s2910 = smul.addr %s2909, 8
        %s2911 = scalar_lea.vmem %s6, %s2910
      $region56: #{tpu_custom_call.1} parent=51 // pred_fallthru
        _
    $region52: #{tpu_custom_call.1} parent=5 // pred_fallthru
      _
  $region6: #{tpu_custom_call.1} parent=0 // loop_footer
    %s16 = sadd.s32 1, %s12
  $region7: #{tpu_custom_call.1} parent=0 // loop_footer_branch
    %11 = sbr.rel target = $region3
  $region8: #{tpu_custom_call.1} parent=0 // loop_exit
    _

</llo_original>
